<compile_context>
chip_gen: v5e
topology: v5e:2x2
jax: 0.10.0
libtpu: 0.0.40
codegen_flags: <defaults>
</compile_context>

<pallas_src>
import functools

import jax
import jax.numpy as jnp
from jax import lax
from jax.experimental import pallas as pl
from jax.experimental.pallas import tpu as pltpu


def _round_up(x, mult):
    return ((x + mult - 1) // mult) * mult


def _make_kernel(n_real, n_pad, h):
    def kernel(vl_ref, q_ref, kt_ref, v_ref, wq_ref, wkt_ref, wv_ref, o_ref):
        Q = q_ref[0]                                   # (tm, q_size)
        KT = kt_ref[0]                                 # (k_size, n_pad)
        V = v_ref[0]                                   # (n_pad, v_pad)
        vl = vl_ref[0]                                 # (tm, 1) int32
        tm = Q.shape[0]

        # Linear projections (no bias) on the MXU with f32 accumulation.
        Qt = jnp.dot(Q, wq_ref[...], preferred_element_type=jnp.float32)     # (tm, h)
        KtT = jnp.dot(wkt_ref[...], KT, preferred_element_type=jnp.float32)  # (h, n_pad)

        # scores[i, j] = sum_c wv[c] * tanh(Qt[i, c] + Kt[j, c])
        # Static unroll over the hidden dim: each step is a rank-1 outer add,
        # a lane-dense 2-D tanh (EUP) and a scalar multiply-accumulate (VPU).
        scores = jnp.zeros((tm, n_pad), jnp.float32)
        for c in range(h):
            qcol = Qt[:, c:c + 1]                      # (tm, 1)
            krow = KtT[c:c + 1, :]                     # (1, n_pad)
            scores = scores + wv_ref[c] * jnp.tanh(qcol + krow)

        # masked_softmax: key positions j >= valid_len[query] get -1e20.
        col_ids = lax.broadcasted_iota(jnp.int32, (tm, n_pad), 1)
        masked = jnp.where(col_ids < vl, scores, jnp.float32(-1e20))
        if n_pad != n_real:
            # Padded key columns never contribute (exact zero weight), even in
            # the valid_len == 0 "uniform average" corner case.
            masked = jnp.where(col_ids < n_real, masked, jnp.float32(-jnp.inf))

        # Numerically stable softmax over the kv axis.  EUP approx reciprocal
        # plus one Newton step: full f32 accuracy without a VALU divide.
        mx = jnp.max(masked, axis=-1, keepdims=True)
        ex = jnp.exp(masked - mx)
        denom = jnp.sum(ex, axis=-1, keepdims=True)
        inv = pl.reciprocal(denom, approx=True)
        inv = inv * (2.0 - denom * inv)
        attn = ex * inv                                # (tm, n_pad)

        # TODO(synk): dropout on the attention weights is omitted (eval-mode identity).

        # Convex combination of the values; attn cast to V.dtype, f32 accumulation.
        out = jnp.dot(attn.astype(V.dtype), V, preferred_element_type=jnp.float32)
        o_ref[0] = out.astype(o_ref.dtype)

    return kernel


def additive_attention(Q, K, V, Wq, Wk, Wv, valid_lens=None, *, max_tm=128):
    """Pallas implementation of AdditiveAttention.forward (eval mode).

    Q: (B, m, q_size), K: (B, n, k_size), V: (B, n, v_size)
    Wq: (q_size, h), Wk: (k_size, h), Wv: (h, 1) (or (1, h) / (h,))
    valid_lens: None, (B,) or (B, m) integer lengths.
    """
    B, m, q_size = Q.shape
    _, n, k_size = K.shape
    v_size = V.shape[-1]
    h = Wq.shape[-1]
    assert Wk.shape == (k_size, h)
    assert jnp.asarray(Wv).size == h
    out_dtype = V.dtype

    # ---- tile / padding geometry -------------------------------------------
    n_pad = _round_up(n, 8)            # sublane-aligned keys/values
    v_pad = _round_up(v_size, 128)     # lane-dense output stores
    tm = min(max_tm, _round_up(m, 8))  # query tile (sublane-aligned)
    m_pad = _round_up(m, tm)
    num_m_tiles = m_pad // tm

    # ---- pad operands (zeros are inert: masked keys / sliced-off rows) ------
    Qp = jnp.pad(Q, ((0, 0), (0, m_pad - m), (0, 0))) if m_pad != m else Q
    Kp = jnp.pad(K, ((0, 0), (0, n_pad - n), (0, 0))) if n_pad != n else K
    Vp = V
    if n_pad != n:
        Vp = jnp.pad(Vp, ((0, 0), (0, n_pad - n), (0, 0)))
    if v_pad != v_size:
        Vp = jnp.pad(Vp, ((0, 0), (0, 0), (0, v_pad - v_size)))

    KT = jnp.swapaxes(Kp, 1, 2)                              # (B, k_size, n_pad)
    Wq_in = jnp.asarray(Wq, dtype=Q.dtype)                   # (q_size, h)
    WkT_in = jnp.swapaxes(jnp.asarray(Wk, dtype=K.dtype), 0, 1)   # (h, k_size)
    Wv_in = jnp.asarray(Wv, dtype=jnp.float32).reshape(h)    # (h,) scalars -> SMEM

    # ---- valid_lens -> per-query (B, m_pad, 1) int32 -------------------------
    if valid_lens is None:
        vl2d = jnp.full((B, m_pad), n, dtype=jnp.int32)
    else:
        valid_lens = jnp.asarray(valid_lens).astype(jnp.int32)
        if valid_lens.ndim == 1:
            vl2d = jnp.broadcast_to(valid_lens[:, None], (B, m))
        else:
            vl2d = valid_lens
        if m_pad != m:
            vl2d = jnp.pad(vl2d, ((0, 0), (0, m_pad - m)), constant_values=n)
    vl3d = vl2d.reshape(B, m_pad, 1)

    # ---- specs ---------------------------------------------------------------
    grid = (B, num_m_tiles)
    in_specs = [
        pl.BlockSpec((1, tm, 1), lambda b, i: (b, i, 0)),            # valid lens
        pl.BlockSpec((1, tm, q_size), lambda b, i: (b, i, 0)),       # Q tile
        pl.BlockSpec((1, k_size, n_pad), lambda b, i: (b, 0, 0)),    # K^T (full, reused per b)
        pl.BlockSpec((1, n_pad, v_pad), lambda b, i: (b, 0, 0)),     # V   (full, reused per b)
        pl.BlockSpec((q_size, h), lambda b, i: (0, 0)),              # W_q
        pl.BlockSpec((h, k_size), lambda b, i: (0, 0)),              # W_k^T
        pl.BlockSpec(memory_space=pltpu.MemorySpace.SMEM),           # w_v scalars
    ]
    out_specs = pl.BlockSpec((1, tm, v_pad), lambda b, i: (b, i, 0))

    # ---- advisory cost estimate & explicit VMEM budget -----------------------
    itemsize = jnp.dtype(Q.dtype).itemsize
    out_itemsize = jnp.dtype(out_dtype).itemsize
    flops = int(2 * B * m_pad * q_size * h
                + 2 * B * num_m_tiles * k_size * h * n_pad
                + 3 * B * m_pad * n_pad * h
                + 2 * B * m_pad * n_pad * v_pad
                + 6 * B * m_pad * n_pad)
    transcendentals = int(B * m_pad * n_pad * (h + 1))
    bytes_accessed = int(
        Qp.size * itemsize
        + num_m_tiles * (KT.size + Vp.size) * itemsize
        + B * num_m_tiles * (Wq_in.size + WkT_in.size) * itemsize
        + 4 * h + vl3d.size * 4
        + B * m_pad * v_pad * out_itemsize)

    tile_bytes = (itemsize * (tm * q_size + k_size * n_pad + n_pad * v_pad
                              + q_size * h + h * k_size)
                  + out_itemsize * tm * v_pad + 4 * tm + 4 * h)
    inter_bytes = 4 * (tm * h + h * n_pad + 6 * tm * n_pad)
    vmem_limit = int(min(max(2 * tile_bytes + inter_bytes + (4 << 20), 32 << 20),
                         48 << 20))

    kernel = _make_kernel(n, n_pad, h)

    out = pl.pallas_call(
        kernel,
        out_shape=jax.ShapeDtypeStruct((B, m_pad, v_pad), out_dtype),
        grid_spec=pltpu.PrefetchScalarGridSpec(
            num_scalar_prefetch=0,
            grid=grid,
            in_specs=in_specs,
            out_specs=out_specs),
        compiler_params=pltpu.CompilerParams(
            dimension_semantics=("parallel", "parallel"),
            vmem_limit_bytes=vmem_limit),
        cost_estimate=pl.CostEstimate(
            flops=flops,
            transcendentals=transcendentals,
            bytes_accessed=bytes_accessed),
    )(vl3d, Qp, KT, Vp, Wq_in, WkT_in, Wv_in)

    # TODO(synk): the module also stashes self.attention_weights; the kernel only
    # returns the pooled output (the weights never leave VMEM).
    return out[:, :m, :v_size]


def _reference(Q, K, V, Wq, Wk, Wv, valid_lens):
    """Pure-JAX reference mirroring the PyTorch forward (1-D / 2-D / None masks)."""
    Qt = jnp.einsum('bmq,qh->bmh', Q, Wq)
    Kt = jnp.einsum('bnk,kh->bnh', K, Wk)
    S = Qt[:, :, None, :] + Kt[:, None, :, :]
    scores = jnp.einsum('bmnh,h->bmn', jnp.tanh(S), jnp.asarray(Wv).reshape(-1))
    if valid_lens is not None:
        n = K.shape[1]
        col = jnp.arange(n)[None, None, :]
        if valid_lens.ndim == 1:
            vl = valid_lens[:, None, None]
        else:
            vl = valid_lens[:, :, None]
        scores = jnp.where(col < vl, scores, -1e20)
    attn = jax.nn.softmax(scores, axis=-1)
    return jnp.einsum('bmn,bnv->bmv', attn, V)


if __name__ == "__main__":
    root = jax.random.PRNGKey(0)
    case_keys = jax.random.split(root, 4)

    def run_case(B, m, n, q_size, k_size, v_size, h, valid_mode, key):
        kq, kk, kv, kwq, kwk, kwv, kvl = jax.random.split(key, 7)
        Q = jax.random.normal(kq, (B, m, q_size), dtype=jnp.float32)
        K = jax.random.normal(kk, (B, n, k_size), dtype=jnp.float32)
        V = jax.random.normal(kv, (B, n, v_size), dtype=jnp.float32)
        Wq = jax.random.normal(kwq, (q_size, h), dtype=jnp.float32) * 0.1
        Wk = jax.random.normal(kwk, (k_size, h), dtype=jnp.float32) * 0.1
        Wv = jax.random.normal(kwv, (h, 1), dtype=jnp.float32) * 0.1
        if valid_mode == "1d":
            valid_lens = jax.random.randint(kvl, (B,), 1, n + 1, dtype=jnp.int32)
        elif valid_mode == "2d":
            valid_lens = jax.random.randint(kvl, (B, m), 1, n + 1, dtype=jnp.int32)
        else:
            valid_lens = None

        out = additive_attention(Q, K, V, Wq, Wk, Wv, valid_lens)
        out = jax.block_until_ready(out)
        ref = _reference(Q, K, V, Wq, Wk, Wv, valid_lens)
        assert out.shape == (B, m, v_size), f"bad shape {out.shape}"
        assert jnp.allclose(out, ref, atol=2e-4, rtol=2e-4), \
            f"mismatch vs reference ({valid_mode}, m={m}, n={n}, h={h})"

    # aligned shapes, 1-D (per-batch) valid_lens
    run_case(2, 8, 8, 16, 16, 32, 32, "1d", case_keys[0])
    # unaligned shapes (exercises m/n/v padding + padded-key masking), 2-D lens
    run_case(2, 6, 37, 16, 16, 24, 8, "2d", case_keys[1])
    # larger kv axis (lane-dense scores), no mask
    run_case(2, 8, 128, 16, 16, 128, 16, "none", case_keys[2])
    # small unaligned shapes, 2-D (per-query) valid_lens
    run_case(2, 6, 10, 16, 16, 24, 24, "2d", case_keys[3])

    print("KERNEL_OK")
</pallas_src>

<mosaic_0001>
module attributes {stable_mosaic.version = 11 : i64} {
  func.func @kernel(%arg0: i32, %arg1: i32, %arg2: memref<1x8x1xi32, #tpu.memory_space<vmem>>, %arg3: memref<1x8x16xf32, #tpu.memory_space<vmem>>, %arg4: memref<1x16x8xf32, #tpu.memory_space<vmem>>, %arg5: memref<1x8x128xf32, #tpu.memory_space<vmem>>, %arg6: memref<16x32xf32, #tpu.memory_space<vmem>>, %arg7: memref<32x16xf32, #tpu.memory_space<vmem>>, %arg8: memref<32xf32, #tpu.memory_space<smem>>, %arg9: memref<1x8x128xf32, #tpu.memory_space<vmem>>) attributes {dimension_semantics = [#tpu.dimension_semantics<parallel>, #tpu.dimension_semantics<parallel>], iteration_bounds = array<i64: 2, 1>, scalar_prefetch = 0 : i64, scratch_operands = 0 : i64, tpu.core_type = #tpu.core_type<tc>, window_params = [{transform_indices = @transform_0, window_bounds = array<i64: 1, 8, 1>}, {transform_indices = @transform_1, window_bounds = array<i64: 1, 8, 16>}, {transform_indices = @transform_2, window_bounds = array<i64: 1, 16, 8>}, {transform_indices = @transform_3, window_bounds = array<i64: 1, 8, 128>}, {pipeline_mode = #tpu.pipeline_mode<synchronous>, transform_indices = @transform_4, window_bounds = array<i64: 16, 32>}, {pipeline_mode = #tpu.pipeline_mode<synchronous>, transform_indices = @transform_5, window_bounds = array<i64: 32, 16>}, {transform_indices = @transform_6, window_bounds = array<i64: 32>}, {transform_indices = @transform_7, window_bounds = array<i64: 1, 8, 128>}]} {
    %c0 = arith.constant 0 : index
    %c0_0 = arith.constant 0 : index
    %c0_1 = arith.constant 0 : index
    %0 = vector.load %arg3[%c0, %c0_0, %c0_1] : memref<1x8x16xf32, #tpu.memory_space<vmem>>, vector<1x8x16xf32>
    %1 = vector.shape_cast %0 : vector<1x8x16xf32> to vector<8x16xf32>
    %c0_2 = arith.constant 0 : index
    %c0_3 = arith.constant 0 : index
    %c0_4 = arith.constant 0 : index
    %2 = vector.load %arg4[%c0_2, %c0_3, %c0_4] : memref<1x16x8xf32, #tpu.memory_space<vmem>>, vector<1x16x8xf32>
    %3 = vector.shape_cast %2 : vector<1x16x8xf32> to vector<16x8xf32>
    %c0_5 = arith.constant 0 : index
    %c0_6 = arith.constant 0 : index
    %c0_7 = arith.constant 0 : index
    %4 = vector.load %arg5[%c0_5, %c0_6, %c0_7] : memref<1x8x128xf32, #tpu.memory_space<vmem>>, vector<1x8x128xf32>
    %5 = vector.shape_cast %4 : vector<1x8x128xf32> to vector<8x128xf32>
    %c0_8 = arith.constant 0 : index
    %c0_9 = arith.constant 0 : index
    %c0_10 = arith.constant 0 : index
    %6 = vector.load %arg2[%c0_8, %c0_9, %c0_10] : memref<1x8x1xi32, #tpu.memory_space<vmem>>, vector<1x8x1xi32>
    %7 = vector.shape_cast %6 : vector<1x8x1xi32> to vector<8x1xi32>
    %c0_11 = arith.constant 0 : index
    %c0_12 = arith.constant 0 : index
    %8 = vector.load %arg6[%c0_11, %c0_12] : memref<16x32xf32, #tpu.memory_space<vmem>>, vector<16x32xf32>
    %cst = arith.constant dense<0.000000e+00> : vector<8x32xf32>
    %9 = tpu.matmul %1, %8, %cst {dimension_numbers = #tpu.dot_dimension_numbers<[1], [0], [0], [1], [0, 0, 1, 1], [], []>} : vector<8x16xf32>, vector<16x32xf32>, vector<8x32xf32> -> vector<8x32xf32>
    %c0_13 = arith.constant 0 : index
    %c0_14 = arith.constant 0 : index
    %10 = vector.load %arg7[%c0_13, %c0_14] : memref<32x16xf32, #tpu.memory_space<vmem>>, vector<32x16xf32>
    %cst_15 = arith.constant dense<0.000000e+00> : vector<32x8xf32>
    %11 = tpu.matmul %10, %3, %cst_15 {dimension_numbers = #tpu.dot_dimension_numbers<[1], [0], [0], [1], [0, 0, 1, 1], [], []>} : vector<32x16xf32>, vector<16x8xf32>, vector<32x8xf32> -> vector<32x8xf32>
    %cst_16 = arith.constant 0.000000e+00 : f32
    %12 = vector.broadcast %cst_16 : f32 to vector<8x8xf32>
    %13 = vector.extract_strided_slice %9 {offsets = [0, 0], sizes = [8, 1], strides = [1, 1]} : vector<8x32xf32> to vector<8x1xf32>
    %14 = vector.extract_strided_slice %11 {offsets = [0, 0], sizes = [1, 8], strides = [1, 1]} : vector<32x8xf32> to vector<1x8xf32>
    %c0_17 = arith.constant 0 : index
    %15 = memref.load %arg8[%c0_17] : memref<32xf32, #tpu.memory_space<smem>>
    %16 = vector.broadcast %13 : vector<8x1xf32> to vector<8x8xf32>
    %17 = vector.broadcast %14 : vector<1x8xf32> to vector<8x8xf32>
    %18 = arith.addf %16, %17 : vector<8x8xf32>
    %19 = math.tanh %18 : vector<8x8xf32>
    %20 = vector.broadcast %15 : f32 to vector<8x8xf32>
    %21 = arith.mulf %20, %19 : vector<8x8xf32>
    %22 = arith.addf %12, %21 : vector<8x8xf32>
    %23 = vector.extract_strided_slice %9 {offsets = [0, 1], sizes = [8, 1], strides = [1, 1]} : vector<8x32xf32> to vector<8x1xf32>
    %24 = vector.extract_strided_slice %11 {offsets = [1, 0], sizes = [1, 8], strides = [1, 1]} : vector<32x8xf32> to vector<1x8xf32>
    %c1 = arith.constant 1 : index
    %25 = memref.load %arg8[%c1] : memref<32xf32, #tpu.memory_space<smem>>
    %26 = vector.broadcast %23 : vector<8x1xf32> to vector<8x8xf32>
    %27 = vector.broadcast %24 : vector<1x8xf32> to vector<8x8xf32>
    %28 = arith.addf %26, %27 : vector<8x8xf32>
    %29 = math.tanh %28 : vector<8x8xf32>
    %30 = vector.broadcast %25 : f32 to vector<8x8xf32>
    %31 = arith.mulf %30, %29 : vector<8x8xf32>
    %32 = arith.addf %22, %31 : vector<8x8xf32>
    %33 = vector.extract_strided_slice %9 {offsets = [0, 2], sizes = [8, 1], strides = [1, 1]} : vector<8x32xf32> to vector<8x1xf32>
    %34 = vector.extract_strided_slice %11 {offsets = [2, 0], sizes = [1, 8], strides = [1, 1]} : vector<32x8xf32> to vector<1x8xf32>
    %c2 = arith.constant 2 : index
    %35 = memref.load %arg8[%c2] : memref<32xf32, #tpu.memory_space<smem>>
    %36 = vector.broadcast %33 : vector<8x1xf32> to vector<8x8xf32>
    %37 = vector.broadcast %34 : vector<1x8xf32> to vector<8x8xf32>
    %38 = arith.addf %36, %37 : vector<8x8xf32>
    %39 = math.tanh %38 : vector<8x8xf32>
    %40 = vector.broadcast %35 : f32 to vector<8x8xf32>
    %41 = arith.mulf %40, %39 : vector<8x8xf32>
    %42 = arith.addf %32, %41 : vector<8x8xf32>
    %43 = vector.extract_strided_slice %9 {offsets = [0, 3], sizes = [8, 1], strides = [1, 1]} : vector<8x32xf32> to vector<8x1xf32>
    %44 = vector.extract_strided_slice %11 {offsets = [3, 0], sizes = [1, 8], strides = [1, 1]} : vector<32x8xf32> to vector<1x8xf32>
    %c3 = arith.constant 3 : index
    %45 = memref.load %arg8[%c3] : memref<32xf32, #tpu.memory_space<smem>>
    %46 = vector.broadcast %43 : vector<8x1xf32> to vector<8x8xf32>
    %47 = vector.broadcast %44 : vector<1x8xf32> to vector<8x8xf32>
    %48 = arith.addf %46, %47 : vector<8x8xf32>
    %49 = math.tanh %48 : vector<8x8xf32>
    %50 = vector.broadcast %45 : f32 to vector<8x8xf32>
    %51 = arith.mulf %50, %49 : vector<8x8xf32>
    %52 = arith.addf %42, %51 : vector<8x8xf32>
    %53 = vector.extract_strided_slice %9 {offsets = [0, 4], sizes = [8, 1], strides = [1, 1]} : vector<8x32xf32> to vector<8x1xf32>
    %54 = vector.extract_strided_slice %11 {offsets = [4, 0], sizes = [1, 8], strides = [1, 1]} : vector<32x8xf32> to vector<1x8xf32>
    %c4 = arith.constant 4 : index
    %55 = memref.load %arg8[%c4] : memref<32xf32, #tpu.memory_space<smem>>
    %56 = vector.broadcast %53 : vector<8x1xf32> to vector<8x8xf32>
    %57 = vector.broadcast %54 : vector<1x8xf32> to vector<8x8xf32>
    %58 = arith.addf %56, %57 : vector<8x8xf32>
    %59 = math.tanh %58 : vector<8x8xf32>
    %60 = vector.broadcast %55 : f32 to vector<8x8xf32>
    %61 = arith.mulf %60, %59 : vector<8x8xf32>
    %62 = arith.addf %52, %61 : vector<8x8xf32>
    %63 = vector.extract_strided_slice %9 {offsets = [0, 5], sizes = [8, 1], strides = [1, 1]} : vector<8x32xf32> to vector<8x1xf32>
    %64 = vector.extract_strided_slice %11 {offsets = [5, 0], sizes = [1, 8], strides = [1, 1]} : vector<32x8xf32> to vector<1x8xf32>
    %c5 = arith.constant 5 : index
    %65 = memref.load %arg8[%c5] : memref<32xf32, #tpu.memory_space<smem>>
    %66 = vector.broadcast %63 : vector<8x1xf32> to vector<8x8xf32>
    %67 = vector.broadcast %64 : vector<1x8xf32> to vector<8x8xf32>
    %68 = arith.addf %66, %67 : vector<8x8xf32>
    %69 = math.tanh %68 : vector<8x8xf32>
    %70 = vector.broadcast %65 : f32 to vector<8x8xf32>
    %71 = arith.mulf %70, %69 : vector<8x8xf32>
    %72 = arith.addf %62, %71 : vector<8x8xf32>
    %73 = vector.extract_strided_slice %9 {offsets = [0, 6], sizes = [8, 1], strides = [1, 1]} : vector<8x32xf32> to vector<8x1xf32>
    %74 = vector.extract_strided_slice %11 {offsets = [6, 0], sizes = [1, 8], strides = [1, 1]} : vector<32x8xf32> to vector<1x8xf32>
    %c6 = arith.constant 6 : index
    %75 = memref.load %arg8[%c6] : memref<32xf32, #tpu.memory_space<smem>>
    %76 = vector.broadcast %73 : vector<8x1xf32> to vector<8x8xf32>
    %77 = vector.broadcast %74 : vector<1x8xf32> to vector<8x8xf32>
    %78 = arith.addf %76, %77 : vector<8x8xf32>
    %79 = math.tanh %78 : vector<8x8xf32>
    %80 = vector.broadcast %75 : f32 to vector<8x8xf32>
    %81 = arith.mulf %80, %79 : vector<8x8xf32>
    %82 = arith.addf %72, %81 : vector<8x8xf32>
    %83 = vector.extract_strided_slice %9 {offsets = [0, 7], sizes = [8, 1], strides = [1, 1]} : vector<8x32xf32> to vector<8x1xf32>
    %84 = vector.extract_strided_slice %11 {offsets = [7, 0], sizes = [1, 8], strides = [1, 1]} : vector<32x8xf32> to vector<1x8xf32>
    %c7 = arith.constant 7 : index
    %85 = memref.load %arg8[%c7] : memref<32xf32, #tpu.memory_space<smem>>
    %86 = vector.broadcast %83 : vector<8x1xf32> to vector<8x8xf32>
    %87 = vector.broadcast %84 : vector<1x8xf32> to vector<8x8xf32>
    %88 = arith.addf %86, %87 : vector<8x8xf32>
    %89 = math.tanh %88 : vector<8x8xf32>
    %90 = vector.broadcast %85 : f32 to vector<8x8xf32>
    %91 = arith.mulf %90, %89 : vector<8x8xf32>
    %92 = arith.addf %82, %91 : vector<8x8xf32>
    %93 = vector.extract_strided_slice %9 {offsets = [0, 8], sizes = [8, 1], strides = [1, 1]} : vector<8x32xf32> to vector<8x1xf32>
    %94 = vector.extract_strided_slice %11 {offsets = [8, 0], sizes = [1, 8], strides = [1, 1]} : vector<32x8xf32> to vector<1x8xf32>
    %c8 = arith.constant 8 : index
    %95 = memref.load %arg8[%c8] : memref<32xf32, #tpu.memory_space<smem>>
    %96 = vector.broadcast %93 : vector<8x1xf32> to vector<8x8xf32>
    %97 = vector.broadcast %94 : vector<1x8xf32> to vector<8x8xf32>
    %98 = arith.addf %96, %97 : vector<8x8xf32>
    %99 = math.tanh %98 : vector<8x8xf32>
    %100 = vector.broadcast %95 : f32 to vector<8x8xf32>
    %101 = arith.mulf %100, %99 : vector<8x8xf32>
    %102 = arith.addf %92, %101 : vector<8x8xf32>
    %103 = vector.extract_strided_slice %9 {offsets = [0, 9], sizes = [8, 1], strides = [1, 1]} : vector<8x32xf32> to vector<8x1xf32>
    %104 = vector.extract_strided_slice %11 {offsets = [9, 0], sizes = [1, 8], strides = [1, 1]} : vector<32x8xf32> to vector<1x8xf32>
    %c9 = arith.constant 9 : index
    %105 = memref.load %arg8[%c9] : memref<32xf32, #tpu.memory_space<smem>>
    %106 = vector.broadcast %103 : vector<8x1xf32> to vector<8x8xf32>
    %107 = vector.broadcast %104 : vector<1x8xf32> to vector<8x8xf32>
    %108 = arith.addf %106, %107 : vector<8x8xf32>
    %109 = math.tanh %108 : vector<8x8xf32>
    %110 = vector.broadcast %105 : f32 to vector<8x8xf32>
    %111 = arith.mulf %110, %109 : vector<8x8xf32>
    %112 = arith.addf %102, %111 : vector<8x8xf32>
    %113 = vector.extract_strided_slice %9 {offsets = [0, 10], sizes = [8, 1], strides = [1, 1]} : vector<8x32xf32> to vector<8x1xf32>
    %114 = vector.extract_strided_slice %11 {offsets = [10, 0], sizes = [1, 8], strides = [1, 1]} : vector<32x8xf32> to vector<1x8xf32>
    %c10 = arith.constant 10 : index
    %115 = memref.load %arg8[%c10] : memref<32xf32, #tpu.memory_space<smem>>
    %116 = vector.broadcast %113 : vector<8x1xf32> to vector<8x8xf32>
    %117 = vector.broadcast %114 : vector<1x8xf32> to vector<8x8xf32>
    %118 = arith.addf %116, %117 : vector<8x8xf32>
    %119 = math.tanh %118 : vector<8x8xf32>
    %120 = vector.broadcast %115 : f32 to vector<8x8xf32>
    %121 = arith.mulf %120, %119 : vector<8x8xf32>
    %122 = arith.addf %112, %121 : vector<8x8xf32>
    %123 = vector.extract_strided_slice %9 {offsets = [0, 11], sizes = [8, 1], strides = [1, 1]} : vector<8x32xf32> to vector<8x1xf32>
    %124 = vector.extract_strided_slice %11 {offsets = [11, 0], sizes = [1, 8], strides = [1, 1]} : vector<32x8xf32> to vector<1x8xf32>
    %c11 = arith.constant 11 : index
    %125 = memref.load %arg8[%c11] : memref<32xf32, #tpu.memory_space<smem>>
    %126 = vector.broadcast %123 : vector<8x1xf32> to vector<8x8xf32>
    %127 = vector.broadcast %124 : vector<1x8xf32> to vector<8x8xf32>
    %128 = arith.addf %126, %127 : vector<8x8xf32>
    %129 = math.tanh %128 : vector<8x8xf32>
    %130 = vector.broadcast %125 : f32 to vector<8x8xf32>
    %131 = arith.mulf %130, %129 : vector<8x8xf32>
    %132 = arith.addf %122, %131 : vector<8x8xf32>
    %133 = vector.extract_strided_slice %9 {offsets = [0, 12], sizes = [8, 1], strides = [1, 1]} : vector<8x32xf32> to vector<8x1xf32>
    %134 = vector.extract_strided_slice %11 {offsets = [12, 0], sizes = [1, 8], strides = [1, 1]} : vector<32x8xf32> to vector<1x8xf32>
    %c12 = arith.constant 12 : index
    %135 = memref.load %arg8[%c12] : memref<32xf32, #tpu.memory_space<smem>>
    %136 = vector.broadcast %133 : vector<8x1xf32> to vector<8x8xf32>
    %137 = vector.broadcast %134 : vector<1x8xf32> to vector<8x8xf32>
    %138 = arith.addf %136, %137 : vector<8x8xf32>
    %139 = math.tanh %138 : vector<8x8xf32>
    %140 = vector.broadcast %135 : f32 to vector<8x8xf32>
    %141 = arith.mulf %140, %139 : vector<8x8xf32>
    %142 = arith.addf %132, %141 : vector<8x8xf32>
    %143 = vector.extract_strided_slice %9 {offsets = [0, 13], sizes = [8, 1], strides = [1, 1]} : vector<8x32xf32> to vector<8x1xf32>
    %144 = vector.extract_strided_slice %11 {offsets = [13, 0], sizes = [1, 8], strides = [1, 1]} : vector<32x8xf32> to vector<1x8xf32>
    %c13 = arith.constant 13 : index
    %145 = memref.load %arg8[%c13] : memref<32xf32, #tpu.memory_space<smem>>
    %146 = vector.broadcast %143 : vector<8x1xf32> to vector<8x8xf32>
    %147 = vector.broadcast %144 : vector<1x8xf32> to vector<8x8xf32>
    %148 = arith.addf %146, %147 : vector<8x8xf32>
    %149 = math.tanh %148 : vector<8x8xf32>
    %150 = vector.broadcast %145 : f32 to vector<8x8xf32>
    %151 = arith.mulf %150, %149 : vector<8x8xf32>
    %152 = arith.addf %142, %151 : vector<8x8xf32>
    %153 = vector.extract_strided_slice %9 {offsets = [0, 14], sizes = [8, 1], strides = [1, 1]} : vector<8x32xf32> to vector<8x1xf32>
    %154 = vector.extract_strided_slice %11 {offsets = [14, 0], sizes = [1, 8], strides = [1, 1]} : vector<32x8xf32> to vector<1x8xf32>
    %c14 = arith.constant 14 : index
    %155 = memref.load %arg8[%c14] : memref<32xf32, #tpu.memory_space<smem>>
    %156 = vector.broadcast %153 : vector<8x1xf32> to vector<8x8xf32>
    %157 = vector.broadcast %154 : vector<1x8xf32> to vector<8x8xf32>
    %158 = arith.addf %156, %157 : vector<8x8xf32>
    %159 = math.tanh %158 : vector<8x8xf32>
    %160 = vector.broadcast %155 : f32 to vector<8x8xf32>
    %161 = arith.mulf %160, %159 : vector<8x8xf32>
    %162 = arith.addf %152, %161 : vector<8x8xf32>
    %163 = vector.extract_strided_slice %9 {offsets = [0, 15], sizes = [8, 1], strides = [1, 1]} : vector<8x32xf32> to vector<8x1xf32>
    %164 = vector.extract_strided_slice %11 {offsets = [15, 0], sizes = [1, 8], strides = [1, 1]} : vector<32x8xf32> to vector<1x8xf32>
    %c15 = arith.constant 15 : index
    %165 = memref.load %arg8[%c15] : memref<32xf32, #tpu.memory_space<smem>>
    %166 = vector.broadcast %163 : vector<8x1xf32> to vector<8x8xf32>
    %167 = vector.broadcast %164 : vector<1x8xf32> to vector<8x8xf32>
    %168 = arith.addf %166, %167 : vector<8x8xf32>
    %169 = math.tanh %168 : vector<8x8xf32>
    %170 = vector.broadcast %165 : f32 to vector<8x8xf32>
    %171 = arith.mulf %170, %169 : vector<8x8xf32>
    %172 = arith.addf %162, %171 : vector<8x8xf32>
    %173 = vector.extract_strided_slice %9 {offsets = [0, 16], sizes = [8, 1], strides = [1, 1]} : vector<8x32xf32> to vector<8x1xf32>
    %174 = vector.extract_strided_slice %11 {offsets = [16, 0], sizes = [1, 8], strides = [1, 1]} : vector<32x8xf32> to vector<1x8xf32>
    %c16 = arith.constant 16 : index
    %175 = memref.load %arg8[%c16] : memref<32xf32, #tpu.memory_space<smem>>
    %176 = vector.broadcast %173 : vector<8x1xf32> to vector<8x8xf32>
    %177 = vector.broadcast %174 : vector<1x8xf32> to vector<8x8xf32>
    %178 = arith.addf %176, %177 : vector<8x8xf32>
    %179 = math.tanh %178 : vector<8x8xf32>
    %180 = vector.broadcast %175 : f32 to vector<8x8xf32>
    %181 = arith.mulf %180, %179 : vector<8x8xf32>
    %182 = arith.addf %172, %181 : vector<8x8xf32>
    %183 = vector.extract_strided_slice %9 {offsets = [0, 17], sizes = [8, 1], strides = [1, 1]} : vector<8x32xf32> to vector<8x1xf32>
    %184 = vector.extract_strided_slice %11 {offsets = [17, 0], sizes = [1, 8], strides = [1, 1]} : vector<32x8xf32> to vector<1x8xf32>
    %c17 = arith.constant 17 : index
    %185 = memref.load %arg8[%c17] : memref<32xf32, #tpu.memory_space<smem>>
    %186 = vector.broadcast %183 : vector<8x1xf32> to vector<8x8xf32>
    %187 = vector.broadcast %184 : vector<1x8xf32> to vector<8x8xf32>
    %188 = arith.addf %186, %187 : vector<8x8xf32>
    %189 = math.tanh %188 : vector<8x8xf32>
    %190 = vector.broadcast %185 : f32 to vector<8x8xf32>
    %191 = arith.mulf %190, %189 : vector<8x8xf32>
    %192 = arith.addf %182, %191 : vector<8x8xf32>
    %193 = vector.extract_strided_slice %9 {offsets = [0, 18], sizes = [8, 1], strides = [1, 1]} : vector<8x32xf32> to vector<8x1xf32>
    %194 = vector.extract_strided_slice %11 {offsets = [18, 0], sizes = [1, 8], strides = [1, 1]} : vector<32x8xf32> to vector<1x8xf32>
    %c18 = arith.constant 18 : index
    %195 = memref.load %arg8[%c18] : memref<32xf32, #tpu.memory_space<smem>>
    %196 = vector.broadcast %193 : vector<8x1xf32> to vector<8x8xf32>
    %197 = vector.broadcast %194 : vector<1x8xf32> to vector<8x8xf32>
    %198 = arith.addf %196, %197 : vector<8x8xf32>
    %199 = math.tanh %198 : vector<8x8xf32>
    %200 = vector.broadcast %195 : f32 to vector<8x8xf32>
    %201 = arith.mulf %200, %199 : vector<8x8xf32>
    %202 = arith.addf %192, %201 : vector<8x8xf32>
    %203 = vector.extract_strided_slice %9 {offsets = [0, 19], sizes = [8, 1], strides = [1, 1]} : vector<8x32xf32> to vector<8x1xf32>
    %204 = vector.extract_strided_slice %11 {offsets = [19, 0], sizes = [1, 8], strides = [1, 1]} : vector<32x8xf32> to vector<1x8xf32>
    %c19 = arith.constant 19 : index
    %205 = memref.load %arg8[%c19] : memref<32xf32, #tpu.memory_space<smem>>
    %206 = vector.broadcast %203 : vector<8x1xf32> to vector<8x8xf32>
    %207 = vector.broadcast %204 : vector<1x8xf32> to vector<8x8xf32>
    %208 = arith.addf %206, %207 : vector<8x8xf32>
    %209 = math.tanh %208 : vector<8x8xf32>
    %210 = vector.broadcast %205 : f32 to vector<8x8xf32>
    %211 = arith.mulf %210, %209 : vector<8x8xf32>
    %212 = arith.addf %202, %211 : vector<8x8xf32>
    %213 = vector.extract_strided_slice %9 {offsets = [0, 20], sizes = [8, 1], strides = [1, 1]} : vector<8x32xf32> to vector<8x1xf32>
    %214 = vector.extract_strided_slice %11 {offsets = [20, 0], sizes = [1, 8], strides = [1, 1]} : vector<32x8xf32> to vector<1x8xf32>
    %c20 = arith.constant 20 : index
    %215 = memref.load %arg8[%c20] : memref<32xf32, #tpu.memory_space<smem>>
    %216 = vector.broadcast %213 : vector<8x1xf32> to vector<8x8xf32>
    %217 = vector.broadcast %214 : vector<1x8xf32> to vector<8x8xf32>
    %218 = arith.addf %216, %217 : vector<8x8xf32>
    %219 = math.tanh %218 : vector<8x8xf32>
    %220 = vector.broadcast %215 : f32 to vector<8x8xf32>
    %221 = arith.mulf %220, %219 : vector<8x8xf32>
    %222 = arith.addf %212, %221 : vector<8x8xf32>
    %223 = vector.extract_strided_slice %9 {offsets = [0, 21], sizes = [8, 1], strides = [1, 1]} : vector<8x32xf32> to vector<8x1xf32>
    %224 = vector.extract_strided_slice %11 {offsets = [21, 0], sizes = [1, 8], strides = [1, 1]} : vector<32x8xf32> to vector<1x8xf32>
    %c21 = arith.constant 21 : index
    %225 = memref.load %arg8[%c21] : memref<32xf32, #tpu.memory_space<smem>>
    %226 = vector.broadcast %223 : vector<8x1xf32> to vector<8x8xf32>
    %227 = vector.broadcast %224 : vector<1x8xf32> to vector<8x8xf32>
    %228 = arith.addf %226, %227 : vector<8x8xf32>
    %229 = math.tanh %228 : vector<8x8xf32>
    %230 = vector.broadcast %225 : f32 to vector<8x8xf32>
    %231 = arith.mulf %230, %229 : vector<8x8xf32>
    %232 = arith.addf %222, %231 : vector<8x8xf32>
    %233 = vector.extract_strided_slice %9 {offsets = [0, 22], sizes = [8, 1], strides = [1, 1]} : vector<8x32xf32> to vector<8x1xf32>
    %234 = vector.extract_strided_slice %11 {offsets = [22, 0], sizes = [1, 8], strides = [1, 1]} : vector<32x8xf32> to vector<1x8xf32>
    %c22 = arith.constant 22 : index
    %235 = memref.load %arg8[%c22] : memref<32xf32, #tpu.memory_space<smem>>
    %236 = vector.broadcast %233 : vector<8x1xf32> to vector<8x8xf32>
    %237 = vector.broadcast %234 : vector<1x8xf32> to vector<8x8xf32>
    %238 = arith.addf %236, %237 : vector<8x8xf32>
    %239 = math.tanh %238 : vector<8x8xf32>
    %240 = vector.broadcast %235 : f32 to vector<8x8xf32>
    %241 = arith.mulf %240, %239 : vector<8x8xf32>
    %242 = arith.addf %232, %241 : vector<8x8xf32>
    %243 = vector.extract_strided_slice %9 {offsets = [0, 23], sizes = [8, 1], strides = [1, 1]} : vector<8x32xf32> to vector<8x1xf32>
    %244 = vector.extract_strided_slice %11 {offsets = [23, 0], sizes = [1, 8], strides = [1, 1]} : vector<32x8xf32> to vector<1x8xf32>
    %c23 = arith.constant 23 : index
    %245 = memref.load %arg8[%c23] : memref<32xf32, #tpu.memory_space<smem>>
    %246 = vector.broadcast %243 : vector<8x1xf32> to vector<8x8xf32>
    %247 = vector.broadcast %244 : vector<1x8xf32> to vector<8x8xf32>
    %248 = arith.addf %246, %247 : vector<8x8xf32>
    %249 = math.tanh %248 : vector<8x8xf32>
    %250 = vector.broadcast %245 : f32 to vector<8x8xf32>
    %251 = arith.mulf %250, %249 : vector<8x8xf32>
    %252 = arith.addf %242, %251 : vector<8x8xf32>
    %253 = vector.extract_strided_slice %9 {offsets = [0, 24], sizes = [8, 1], strides = [1, 1]} : vector<8x32xf32> to vector<8x1xf32>
    %254 = vector.extract_strided_slice %11 {offsets = [24, 0], sizes = [1, 8], strides = [1, 1]} : vector<32x8xf32> to vector<1x8xf32>
    %c24 = arith.constant 24 : index
    %255 = memref.load %arg8[%c24] : memref<32xf32, #tpu.memory_space<smem>>
    %256 = vector.broadcast %253 : vector<8x1xf32> to vector<8x8xf32>
    %257 = vector.broadcast %254 : vector<1x8xf32> to vector<8x8xf32>
    %258 = arith.addf %256, %257 : vector<8x8xf32>
    %259 = math.tanh %258 : vector<8x8xf32>
    %260 = vector.broadcast %255 : f32 to vector<8x8xf32>
    %261 = arith.mulf %260, %259 : vector<8x8xf32>
    %262 = arith.addf %252, %261 : vector<8x8xf32>
    %263 = vector.extract_strided_slice %9 {offsets = [0, 25], sizes = [8, 1], strides = [1, 1]} : vector<8x32xf32> to vector<8x1xf32>
    %264 = vector.extract_strided_slice %11 {offsets = [25, 0], sizes = [1, 8], strides = [1, 1]} : vector<32x8xf32> to vector<1x8xf32>
    %c25 = arith.constant 25 : index
    %265 = memref.load %arg8[%c25] : memref<32xf32, #tpu.memory_space<smem>>
    %266 = vector.broadcast %263 : vector<8x1xf32> to vector<8x8xf32>
    %267 = vector.broadcast %264 : vector<1x8xf32> to vector<8x8xf32>
    %268 = arith.addf %266, %267 : vector<8x8xf32>
    %269 = math.tanh %268 : vector<8x8xf32>
    %270 = vector.broadcast %265 : f32 to vector<8x8xf32>
    %271 = arith.mulf %270, %269 : vector<8x8xf32>
    %272 = arith.addf %262, %271 : vector<8x8xf32>
    %273 = vector.extract_strided_slice %9 {offsets = [0, 26], sizes = [8, 1], strides = [1, 1]} : vector<8x32xf32> to vector<8x1xf32>
    %274 = vector.extract_strided_slice %11 {offsets = [26, 0], sizes = [1, 8], strides = [1, 1]} : vector<32x8xf32> to vector<1x8xf32>
    %c26 = arith.constant 26 : index
    %275 = memref.load %arg8[%c26] : memref<32xf32, #tpu.memory_space<smem>>
    %276 = vector.broadcast %273 : vector<8x1xf32> to vector<8x8xf32>
    %277 = vector.broadcast %274 : vector<1x8xf32> to vector<8x8xf32>
    %278 = arith.addf %276, %277 : vector<8x8xf32>
    %279 = math.tanh %278 : vector<8x8xf32>
    %280 = vector.broadcast %275 : f32 to vector<8x8xf32>
    %281 = arith.mulf %280, %279 : vector<8x8xf32>
    %282 = arith.addf %272, %281 : vector<8x8xf32>
    %283 = vector.extract_strided_slice %9 {offsets = [0, 27], sizes = [8, 1], strides = [1, 1]} : vector<8x32xf32> to vector<8x1xf32>
    %284 = vector.extract_strided_slice %11 {offsets = [27, 0], sizes = [1, 8], strides = [1, 1]} : vector<32x8xf32> to vector<1x8xf32>
    %c27 = arith.constant 27 : index
    %285 = memref.load %arg8[%c27] : memref<32xf32, #tpu.memory_space<smem>>
    %286 = vector.broadcast %283 : vector<8x1xf32> to vector<8x8xf32>
    %287 = vector.broadcast %284 : vector<1x8xf32> to vector<8x8xf32>
    %288 = arith.addf %286, %287 : vector<8x8xf32>
    %289 = math.tanh %288 : vector<8x8xf32>
    %290 = vector.broadcast %285 : f32 to vector<8x8xf32>
    %291 = arith.mulf %290, %289 : vector<8x8xf32>
    %292 = arith.addf %282, %291 : vector<8x8xf32>
    %293 = vector.extract_strided_slice %9 {offsets = [0, 28], sizes = [8, 1], strides = [1, 1]} : vector<8x32xf32> to vector<8x1xf32>
    %294 = vector.extract_strided_slice %11 {offsets = [28, 0], sizes = [1, 8], strides = [1, 1]} : vector<32x8xf32> to vector<1x8xf32>
    %c28 = arith.constant 28 : index
    %295 = memref.load %arg8[%c28] : memref<32xf32, #tpu.memory_space<smem>>
    %296 = vector.broadcast %293 : vector<8x1xf32> to vector<8x8xf32>
    %297 = vector.broadcast %294 : vector<1x8xf32> to vector<8x8xf32>
    %298 = arith.addf %296, %297 : vector<8x8xf32>
    %299 = math.tanh %298 : vector<8x8xf32>
    %300 = vector.broadcast %295 : f32 to vector<8x8xf32>
    %301 = arith.mulf %300, %299 : vector<8x8xf32>
    %302 = arith.addf %292, %301 : vector<8x8xf32>
    %303 = vector.extract_strided_slice %9 {offsets = [0, 29], sizes = [8, 1], strides = [1, 1]} : vector<8x32xf32> to vector<8x1xf32>
    %304 = vector.extract_strided_slice %11 {offsets = [29, 0], sizes = [1, 8], strides = [1, 1]} : vector<32x8xf32> to vector<1x8xf32>
    %c29 = arith.constant 29 : index
    %305 = memref.load %arg8[%c29] : memref<32xf32, #tpu.memory_space<smem>>
    %306 = vector.broadcast %303 : vector<8x1xf32> to vector<8x8xf32>
    %307 = vector.broadcast %304 : vector<1x8xf32> to vector<8x8xf32>
    %308 = arith.addf %306, %307 : vector<8x8xf32>
    %309 = math.tanh %308 : vector<8x8xf32>
    %310 = vector.broadcast %305 : f32 to vector<8x8xf32>
    %311 = arith.mulf %310, %309 : vector<8x8xf32>
    %312 = arith.addf %302, %311 : vector<8x8xf32>
    %313 = vector.extract_strided_slice %9 {offsets = [0, 30], sizes = [8, 1], strides = [1, 1]} : vector<8x32xf32> to vector<8x1xf32>
    %314 = vector.extract_strided_slice %11 {offsets = [30, 0], sizes = [1, 8], strides = [1, 1]} : vector<32x8xf32> to vector<1x8xf32>
    %c30 = arith.constant 30 : index
    %315 = memref.load %arg8[%c30] : memref<32xf32, #tpu.memory_space<smem>>
    %316 = vector.broadcast %313 : vector<8x1xf32> to vector<8x8xf32>
    %317 = vector.broadcast %314 : vector<1x8xf32> to vector<8x8xf32>
    %318 = arith.addf %316, %317 : vector<8x8xf32>
    %319 = math.tanh %318 : vector<8x8xf32>
    %320 = vector.broadcast %315 : f32 to vector<8x8xf32>
    %321 = arith.mulf %320, %319 : vector<8x8xf32>
    %322 = arith.addf %312, %321 : vector<8x8xf32>
    %323 = vector.extract_strided_slice %9 {offsets = [0, 31], sizes = [8, 1], strides = [1, 1]} : vector<8x32xf32> to vector<8x1xf32>
    %324 = vector.extract_strided_slice %11 {offsets = [31, 0], sizes = [1, 8], strides = [1, 1]} : vector<32x8xf32> to vector<1x8xf32>
    %c31 = arith.constant 31 : index
    %325 = memref.load %arg8[%c31] : memref<32xf32, #tpu.memory_space<smem>>
    %326 = vector.broadcast %323 : vector<8x1xf32> to vector<8x8xf32>
    %327 = vector.broadcast %324 : vector<1x8xf32> to vector<8x8xf32>
    %328 = arith.addf %326, %327 : vector<8x8xf32>
    %329 = math.tanh %328 : vector<8x8xf32>
    %330 = vector.broadcast %325 : f32 to vector<8x8xf32>
    %331 = arith.mulf %330, %329 : vector<8x8xf32>
    %332 = arith.addf %322, %331 : vector<8x8xf32>
    %333 = tpu.iota {dimensions = array<i32: 1>} : vector<8x8xi32>
    %334 = vector.broadcast %7 : vector<8x1xi32> to vector<8x8xi32>
    %335 = arith.cmpi slt, %333, %334 : vector<8x8xi32>
    %cst_18 = arith.constant -1.000000e+20 : f32
    %336 = vector.broadcast %cst_18 : f32 to vector<8x8xf32>
    %337 = arith.select %335, %332, %336 : vector<8x8xi1>, vector<8x8xf32>
    %cst_19 = arith.constant dense<0xFF800000> : vector<8xf32>
    %338 = vector.multi_reduction <maximumf>, %337, %cst_19 [1] : vector<8x8xf32> to vector<8xf32>
    %339 = vector.shape_cast %338 : vector<8xf32> to vector<8x1xf32>
    %340 = vector.broadcast %339 : vector<8x1xf32> to vector<8x8xf32>
    %341 = arith.subf %337, %340 : vector<8x8xf32>
    %342 = math.exp %341 : vector<8x8xf32>
    %cst_20 = arith.constant dense<0.000000e+00> : vector<8xf32>
    %343 = vector.multi_reduction <add>, %342, %cst_20 [1] : vector<8x8xf32> to vector<8xf32>
    %344 = vector.shape_cast %343 : vector<8xf32> to vector<8x1xf32>
    %345 = tpu.reciprocal %344 {approx = true} : vector<8x1xf32> -> vector<8x1xf32>
    %346 = arith.mulf %344, %345 : vector<8x1xf32>
    %cst_21 = arith.constant 2.000000e+00 : f32
    %347 = vector.broadcast %cst_21 : f32 to vector<8x1xf32>
    %348 = arith.subf %347, %346 : vector<8x1xf32>
    %349 = arith.mulf %345, %348 : vector<8x1xf32>
    %350 = vector.broadcast %349 : vector<8x1xf32> to vector<8x8xf32>
    %351 = arith.mulf %342, %350 : vector<8x8xf32>
    %cst_22 = arith.constant dense<0.000000e+00> : vector<8x128xf32>
    %352 = tpu.matmul %351, %5, %cst_22 {dimension_numbers = #tpu.dot_dimension_numbers<[1], [0], [0], [1], [0, 0, 1, 1], [], []>} : vector<8x8xf32>, vector<8x128xf32>, vector<8x128xf32> -> vector<8x128xf32>
    %c0_23 = arith.constant 0 : index
    %c0_24 = arith.constant 0 : index
    %c0_25 = arith.constant 0 : index
    %353 = vector.load %arg9[%c0_23, %c0_24, %c0_25] : memref<1x8x128xf32, #tpu.memory_space<vmem>>, vector<1x8x128xf32>
    %354 = vector.shape_cast %353 : vector<1x8x128xf32> to vector<8x128xf32>
    %355 = vector.shape_cast %352 : vector<8x128xf32> to vector<1x8x128xf32>
    tpu.vector_store %arg9[%c0_23, %c0_24, %c0_25], %355 {strides = array<i32>} : memref<1x8x128xf32, #tpu.memory_space<vmem>>, vector<1x8x128xf32>,
    return
  }
  func.func @transform_0(%arg0: i32, %arg1: i32) -> (i32, i32, i32) {
    %c0_i32 = arith.constant 0 : i32
    %c0_i32_0 = arith.constant 0 : i32
    return %arg0, %arg1, %c0_i32 : i32, i32, i32
  }
  func.func @transform_1(%arg0: i32, %arg1: i32) -> (i32, i32, i32) {
    %c0_i32 = arith.constant 0 : i32
    %c0_i32_0 = arith.constant 0 : i32
    return %arg0, %arg1, %c0_i32 : i32, i32, i32
  }
  func.func @transform_2(%arg0: i32, %arg1: i32) -> (i32, i32, i32) {
    %c0_i32 = arith.constant 0 : i32
    %c0_i32_0 = arith.constant 0 : i32
    %c0_i32_1 = arith.constant 0 : i32
    return %arg0, %c0_i32, %c0_i32_0 : i32, i32, i32
  }
  func.func @transform_3(%arg0: i32, %arg1: i32) -> (i32, i32, i32) {
    %c0_i32 = arith.constant 0 : i32
    %c0_i32_0 = arith.constant 0 : i32
    %c0_i32_1 = arith.constant 0 : i32
    return %arg0, %c0_i32, %c0_i32_0 : i32, i32, i32
  }
  func.func @transform_4(%arg0: i32, %arg1: i32) -> (i32, i32) {
    %c0_i32 = arith.constant 0 : i32
    %c0_i32_0 = arith.constant 0 : i32
    %c0_i32_1 = arith.constant 0 : i32
    return %c0_i32, %c0_i32_0 : i32, i32
  }
  func.func @transform_5(%arg0: i32, %arg1: i32) -> (i32, i32) {
    %c0_i32 = arith.constant 0 : i32
    %c0_i32_0 = arith.constant 0 : i32
    %c0_i32_1 = arith.constant 0 : i32
    return %c0_i32, %c0_i32_0 : i32, i32
  }
  func.func @transform_6(%arg0: i32, %arg1: i32) -> i32 {
    %c0_i32 = arith.constant 0 : i32
    %c0_i32_0 = arith.constant 0 : i32
    return %c0_i32 : i32
  }
  func.func @transform_7(%arg0: i32, %arg1: i32) -> (i32, i32, i32) {
    %c0_i32 = arith.constant 0 : i32
    %c0_i32_0 = arith.constant 0 : i32
    return %arg0, %arg1, %c0_i32 : i32, i32, i32
  }
}

</mosaic_0001>

<llo_original>
// kernel: tpu_custom_call.1
$region0: #{tpu_custom_call.1}
  #allocation0 [shape = 'u32[]', space=smem, size = 0x4, offset = 0x4, fixed_abs, tag = 'smem constant byte address 0x4 - core index']
  #allocation1 [shape = 'u32[72,128]{1,0:T(1,128)}', space=vmem, size = 0x9000, scoped, tag = 'internal scratch']
  %s0 = inlined_call_operand.vmem [shape: s32[2,8,1], index: 0, kind: input, shape index: {}]
  %s1 = inlined_call_operand.vmem [shape: f32[2,8,16], index: 1, kind: input, shape index: {}]
  %s2 = inlined_call_operand.vmem [shape: f32[2,16,8], index: 2, kind: input, shape index: {}]
  %s3 = inlined_call_operand.vmem [shape: f32[2,8,128], index: 3, kind: input, shape index: {}]
  %s4 = inlined_call_operand.vmem [shape: f32[16,32], index: 4, kind: input, shape index: {}]
  %s5 = inlined_call_operand.vmem [shape: f32[32,16], index: 5, kind: input, shape index: {}]
  %s6 = inlined_call_operand.vmem [shape: f32[32], index: 6, kind: input, shape index: {}]
  %s7 = inlined_call_operand.hbm [shape: f32[2,8,128], index: 7, kind: output, shape index: {}]
  %s8 = sld [smem:[#allocation0]]
  $region65: #{tpu_custom_call.1} parent=0
    _
  %s10 = ssub.s32 1, %s8
  %s11 = scalar_select 0, %s10, %s8
  $region1: #{tpu_custom_call.1} parent=0
    #allocation2 [shape = 'u8[512]{0}', space=smem, size = 0x200, scoped, tag = 'input window, operand 6, single buffered']
    #allocation3 [shape = 's32[2]{0}', space=sflag, size = 0x8, scoped, tag = 'scoped memory for tpu_custom_call.1']
    #allocation4 [shape = 's32[2]{0}', space=sflag, size = 0x8, scoped, tag = 'scoped memory for tpu_custom_call.1']
    #allocation5 [shape = 'u8[8192]{0}', space=vmem, size = 0x2000, scoped, tag = 'output window, operand 0']
    %12 = vsyncpa [#allocation4], 0
    %13 = vsyncpa [#allocation3], 0
    %s14 = scalar_lea.sflag [#allocation3], 1
    %15 = vsyncpa %s14, 0
    loop: start=0, step=1, limit=4
    $region2: #{tpu_custom_call.1} parent=1 // loop_pre_header
      _
    $region3: #{tpu_custom_call.1} parent=1 // loop_header
      %s17 = sphi 0, %s21
      %p18 = scmp.ge.s32.totalorder %s17, 4
      %s24 = sphi 0, %s36
      %s25 = sphi 0, %s32
      %s26 = sphi 0, %s24
      %s27 = sphi 0, %s25
      %s28 = sphi 0, %s26
      %s29 = sphi 0, %s27
      %s41 = sphi 0, %s43
      %s44 = sphi 0, %s41
      %s45 = sphi 0, %s44
      %s61 = sphi 0, %s45
      %s69 = sphi 0, %s71
      %s72 = sphi 0, %s69
      %s73 = sphi 0, %s72
      %s89 = sphi 0, %s73
      %s95 = sphi 0, %s97
      %s98 = sphi 0, %s95
      %s99 = sphi 0, %s98
      %s115 = sphi 0, %s99
      %s121 = sphi 0, %s123
      %s124 = sphi 0, %s121
      %s125 = sphi 0, %s124
      %s141 = sphi 0, %s125
      %s145 = sphi 0, %s145
      %s147 = sphi 0, %s145
      %s148 = sphi 0, %s147
      %s162 = sphi 0, %s148
      %s166 = sphi 0, %s166
      %s168 = sphi 0, %s166
      %s169 = sphi 0, %s168
      %s183 = sphi 0, %s169
      %s187 = sphi 0, %s187
      %s189 = sphi 0, %s187
      %s190 = sphi 0, %s189
      %s204 = sphi 0, %s190
      %s212 = sphi 0, %s214
      %s215 = sphi 0, %s212
      %s216 = sphi 0, %s215
      %s232 = sphi 0, %s216
    $region4: #{tpu_custom_call.1} parent=1 // loop_header_branch
      %20 = sbr.rel (%p18) target = $region8
    $region5: #{tpu_custom_call.1} parent=1 // loop_body
      %s22 = ssub.s32 %s17, 1
      %s23 = ssub.s32 %s17, 2
      %s30 = sadd.s32 1, %s25
      %p31 = scmp.ge.s32.totalorder %s30, 1
      %s32 = scalar_select %p31, 0, %s30
      %s33 = sadd.s32 1, %s24
      %s34 = scalar_select %p31, %s33, %s24
      %p35 = scmp.ge.s32.totalorder %s34, 2
      %s36 = scalar_select %p35, 0, %s34
      %s37 = ssub.s32 %s24, %s36
      %s38 = ssub.s32 %s25, %s32
      %s39 = sor.u32 %s37, %s38
      %p40 = scmp.eq.s32.totalorder %s39, 0
      %s42 = sadd.s32 %s41, 1
      %s43 = scalar_select %p40, %s41, %s42
      %p46 = pneg %p40
      %p47 = scmp.eq.s32.totalorder %s17, 1
      %p48 = por %p46, %p47
      %p49 = scmp.ne.s32.totalorder %s41, %s44
      %p50 = scmp.eq.s32.totalorder %s17, 0
      %p51 = por %p49, %p50
      %p52 = scmp.ne.s32.totalorder %s41, %s44
      %p53 = scmp.eq.s32.totalorder %s22, 1
      %p54 = por %p52, %p53
      %p55 = scmp.ne.s32.totalorder %s44, %s45
      %p56 = scmp.eq.s32.totalorder %s22, 0
      %p57 = por %p55, %p56
      %p58 = scmp.ne.s32.totalorder %s44, %s45
      %p59 = scmp.eq.s32.totalorder %s23, 1
      %p60 = por %p58, %p59
      %p62 = scmp.ne.s32.totalorder %s45, %s61
      %p63 = scmp.eq.s32.totalorder %s23, 0
      %p64 = por %p62, %p63
      %s65 = ssub.s32 %s24, %s36
      %s66 = ssub.s32 %s25, %s32
      %s67 = sor.u32 %s65, %s66
      %p68 = scmp.eq.s32.totalorder %s67, 0
      %s70 = sadd.s32 %s69, 1
      %s71 = scalar_select %p68, %s69, %s70
      %p74 = pneg %p68
      %p75 = scmp.eq.s32.totalorder %s17, 1
      %p76 = por %p74, %p75
      %p77 = scmp.ne.s32.totalorder %s69, %s72
      %p78 = scmp.eq.s32.totalorder %s17, 0
      %p79 = por %p77, %p78
      %p80 = scmp.ne.s32.totalorder %s69, %s72
      %p81 = scmp.eq.s32.totalorder %s22, 1
      %p82 = por %p80, %p81
      %p83 = scmp.ne.s32.totalorder %s72, %s73
      %p84 = scmp.eq.s32.totalorder %s22, 0
      %p85 = por %p83, %p84
      %p86 = scmp.ne.s32.totalorder %s72, %s73
      %p87 = scmp.eq.s32.totalorder %s23, 1
      %p88 = por %p86, %p87
      %p90 = scmp.ne.s32.totalorder %s73, %s89
      %p91 = scmp.eq.s32.totalorder %s23, 0
      %p92 = por %p90, %p91
      %s93 = ssub.s32 %s24, %s36
      %p94 = scmp.eq.s32.totalorder %s93, 0
      %s96 = sadd.s32 %s95, 1
      %s97 = scalar_select %p94, %s95, %s96
      %p100 = pneg %p94
      %p101 = scmp.eq.s32.totalorder %s17, 1
      %p102 = por %p100, %p101
      %p103 = scmp.ne.s32.totalorder %s95, %s98
      %p104 = scmp.eq.s32.totalorder %s17, 0
      %p105 = por %p103, %p104
      %p106 = scmp.ne.s32.totalorder %s95, %s98
      %p107 = scmp.eq.s32.totalorder %s22, 1
      %p108 = por %p106, %p107
      %p109 = scmp.ne.s32.totalorder %s98, %s99
      %p110 = scmp.eq.s32.totalorder %s22, 0
      %p111 = por %p109, %p110
      %p112 = scmp.ne.s32.totalorder %s98, %s99
      %p113 = scmp.eq.s32.totalorder %s23, 1
      %p114 = por %p112, %p113
      %p116 = scmp.ne.s32.totalorder %s99, %s115
      %p117 = scmp.eq.s32.totalorder %s23, 0
      %p118 = por %p116, %p117
      %s119 = ssub.s32 %s24, %s36
      %p120 = scmp.eq.s32.totalorder %s119, 0
      %s122 = sadd.s32 %s121, 1
      %s123 = scalar_select %p120, %s121, %s122
      %p126 = pneg %p120
      %p127 = scmp.eq.s32.totalorder %s17, 1
      %p128 = por %p126, %p127
      %p129 = scmp.ne.s32.totalorder %s121, %s124
      %p130 = scmp.eq.s32.totalorder %s17, 0
      %p131 = por %p129, %p130
      %p132 = scmp.ne.s32.totalorder %s121, %s124
      %p133 = scmp.eq.s32.totalorder %s22, 1
      %p134 = por %p132, %p133
      %p135 = scmp.ne.s32.totalorder %s124, %s125
      %p136 = scmp.eq.s32.totalorder %s22, 0
      %p137 = por %p135, %p136
      %p138 = scmp.ne.s32.totalorder %s124, %s125
      %p139 = scmp.eq.s32.totalorder %s23, 1
      %p140 = por %p138, %p139
      %p142 = scmp.ne.s32.totalorder %s125, %s141
      %p143 = scmp.eq.s32.totalorder %s23, 0
      %p144 = por %p142, %p143
      %s146 = sadd.s32 %s145, 1
      %p149 = scmp.eq.s32.totalorder %s17, 1
      %p150 = scmp.ne.s32.totalorder %s145, %s147
      %p151 = scmp.eq.s32.totalorder %s17, 0
      %p152 = por %p150, %p151
      %p153 = scmp.ne.s32.totalorder %s145, %s147
      %p154 = scmp.eq.s32.totalorder %s22, 1
      %p155 = por %p153, %p154
      %p156 = scmp.ne.s32.totalorder %s147, %s148
      %p157 = scmp.eq.s32.totalorder %s22, 0
      %p158 = por %p156, %p157
      %p159 = scmp.ne.s32.totalorder %s147, %s148
      %p160 = scmp.eq.s32.totalorder %s23, 1
      %p161 = por %p159, %p160
      %p163 = scmp.ne.s32.totalorder %s148, %s162
      %p164 = scmp.eq.s32.totalorder %s23, 0
      %p165 = por %p163, %p164
      %s167 = sadd.s32 %s166, 1
      %p170 = scmp.eq.s32.totalorder %s17, 1
      %p171 = scmp.ne.s32.totalorder %s166, %s168
      %p172 = scmp.eq.s32.totalorder %s17, 0
      %p173 = por %p171, %p172
      %p174 = scmp.ne.s32.totalorder %s166, %s168
      %p175 = scmp.eq.s32.totalorder %s22, 1
      %p176 = por %p174, %p175
      %p177 = scmp.ne.s32.totalorder %s168, %s169
      %p178 = scmp.eq.s32.totalorder %s22, 0
      %p179 = por %p177, %p178
      %p180 = scmp.ne.s32.totalorder %s168, %s169
      %p181 = scmp.eq.s32.totalorder %s23, 1
      %p182 = por %p180, %p181
      %p184 = scmp.ne.s32.totalorder %s169, %s183
      %p185 = scmp.eq.s32.totalorder %s23, 0
      %p186 = por %p184, %p185
      %s188 = sadd.s32 %s187, 1
      %p191 = scmp.eq.s32.totalorder %s17, 1
      %p192 = scmp.ne.s32.totalorder %s187, %s189
      %p193 = scmp.eq.s32.totalorder %s17, 0
      %p194 = por %p192, %p193
      %p195 = scmp.ne.s32.totalorder %s187, %s189
      %p196 = scmp.eq.s32.totalorder %s22, 1
      %p197 = por %p195, %p196
      %p198 = scmp.ne.s32.totalorder %s189, %s190
      %p199 = scmp.eq.s32.totalorder %s22, 0
      %p200 = por %p198, %p199
      %p201 = scmp.ne.s32.totalorder %s189, %s190
      %p202 = scmp.eq.s32.totalorder %s23, 1
      %p203 = por %p201, %p202
      %p205 = scmp.ne.s32.totalorder %s190, %s204
      %p206 = scmp.eq.s32.totalorder %s23, 0
      %p207 = por %p205, %p206
      %s208 = ssub.s32 %s24, %s36
      %s209 = ssub.s32 %s25, %s32
      %s210 = sor.u32 %s208, %s209
      %p211 = scmp.eq.s32.totalorder %s210, 0
      %s213 = sadd.s32 %s212, 1
      %s214 = scalar_select %p211, %s212, %s213
      %p217 = pneg %p211
      %p218 = scmp.eq.s32.totalorder %s17, 1
      %p219 = por %p217, %p218
      %p220 = scmp.ne.s32.totalorder %s212, %s215
      %p221 = scmp.eq.s32.totalorder %s17, 0
      %p222 = por %p220, %p221
      %p223 = scmp.ne.s32.totalorder %s212, %s215
      %p224 = scmp.eq.s32.totalorder %s22, 1
      %p225 = por %p223, %p224
      %p226 = scmp.ne.s32.totalorder %s215, %s216
      %p227 = scmp.eq.s32.totalorder %s22, 0
      %p228 = por %p226, %p227
      %p229 = scmp.ne.s32.totalorder %s215, %s216
      %p230 = scmp.eq.s32.totalorder %s23, 1
      %p231 = por %p229, %p230
      %p233 = scmp.ne.s32.totalorder %s216, %s232
      %p234 = scmp.eq.s32.totalorder %s23, 0
      %p235 = por %p233, %p234
      %p236 = scmp.le.s32.totalorder 1, %s17
      %p237 = scmp.lt.s32.totalorder %s17, 3
      %p238 = pnand %p236, %p237
      %p239 = pneg %p238
      // Predicated region
      $region9: #{tpu_custom_call.1} parent=5 // pred_check
        _
      $region10: #{tpu_custom_call.1} parent=5 // pred_check_branch
        %241 = sbr.rel (%p238) target = $region12
      $region11: #{tpu_custom_call.1} parent=5 // pred_region
        %s242 = ssub.s32 %s17, 1
        // Predicated region
        $region13: #{tpu_custom_call.1} parent=11 // pred_check
          %p243 = pneg %p158
        $region14: #{tpu_custom_call.1} parent=11 // pred_check_branch
          %245 = sbr.rel (%p243) target = $region16
        $region15: #{tpu_custom_call.1} parent=11 // pred_region
          _
        $region16: #{tpu_custom_call.1} parent=11 // pred_fallthru
          _
        // Predicated region
        $region17: #{tpu_custom_call.1} parent=11 // pred_check
          %p246 = pneg %p179
        $region18: #{tpu_custom_call.1} parent=11 // pred_check_branch
          %248 = sbr.rel (%p246) target = $region20
        $region19: #{tpu_custom_call.1} parent=11 // pred_region
          _
        $region20: #{tpu_custom_call.1} parent=11 // pred_fallthru
          _
        // Predicated region
        $region21: #{tpu_custom_call.1} parent=11 // pred_check
          %p249 = pneg %p200
        $region22: #{tpu_custom_call.1} parent=11 // pred_check_branch
          %251 = sbr.rel (%p249) target = $region24
        $region23: #{tpu_custom_call.1} parent=11 // pred_region
          %253 = vsyncadd [#allocation4], 0
          %s255 = sshll.u32 %s6, 4
          %s256 = int_to_ptr.vmem [resolvable:$true] %s255
          %258 = dma.vmem_to_smem %s256, 16, [#allocation2], [#allocation4]
        $region24: #{tpu_custom_call.1} parent=11 // pred_fallthru
          _
      $region12: #{tpu_custom_call.1} parent=5 // pred_fallthru
        _
      %p259 = scmp.lt.s32.totalorder %s17, 2
      // Predicated region
      $region25: #{tpu_custom_call.1} parent=5 // pred_check
        %p260 = pneg %p259
      $region26: #{tpu_custom_call.1} parent=5 // pred_check_branch
        %262 = sbr.rel (%p260) target = $region28
      $region27: #{tpu_custom_call.1} parent=5 // pred_region
        // Predicated region
        $region29: #{tpu_custom_call.1} parent=27 // pred_check
          %p263 = pneg %p51
        $region30: #{tpu_custom_call.1} parent=27 // pred_check_branch
          %265 = sbr.rel (%p263) target = $region32
        $region31: #{tpu_custom_call.1} parent=27 // pred_region
          %p266 = scmp.lt.s32.totalorder %s24, 1
          %s267 = scalar_select %p266, %s24, 1
          %p268 = scmp.lt.s32.totalorder %s25, 0
          %s269 = scalar_select %p268, %s25, 0
          %s270 = sadd.s32 %s269, %s267
          %s271 = smul.addr %s270, 8
          %s272 = scalar_lea.vmem %s0, %s271
        $region32: #{tpu_custom_call.1} parent=27 // pred_fallthru
          _
        // Predicated region
        $region33: #{tpu_custom_call.1} parent=27 // pred_check
          %p273 = pneg %p79
        $region34: #{tpu_custom_call.1} parent=27 // pred_check_branch
          %275 = sbr.rel (%p273) target = $region36
        $region35: #{tpu_custom_call.1} parent=27 // pred_region
          %p276 = scmp.lt.s32.totalorder %s24, 1
          %s277 = scalar_select %p276, %s24, 1
          %p278 = scmp.lt.s32.totalorder %s25, 0
          %s279 = scalar_select %p278, %s25, 0
          %s280 = sadd.s32 %s279, %s277
          %s281 = smul.addr %s280, 8
          %s282 = scalar_lea.vmem %s1, %s281
        $region36: #{tpu_custom_call.1} parent=27 // pred_fallthru
          _
        // Predicated region
        $region37: #{tpu_custom_call.1} parent=27 // pred_check
          %p283 = pneg %p105
        $region38: #{tpu_custom_call.1} parent=27 // pred_check_branch
          %285 = sbr.rel (%p283) target = $region40
        $region39: #{tpu_custom_call.1} parent=27 // pred_region
          %p286 = scmp.lt.s32.totalorder %s24, 1
          %s287 = scalar_select %p286, %s24, 1
          %s288 = smul.addr %s287, 2
          %s289 = smul.addr %s288, 8
          %s290 = scalar_lea.vmem %s2, %s289
        $region40: #{tpu_custom_call.1} parent=27 // pred_fallthru
          _
        // Predicated region
        $region41: #{tpu_custom_call.1} parent=27 // pred_check
          %p291 = pneg %p131
        $region42: #{tpu_custom_call.1} parent=27 // pred_check_branch
          %293 = sbr.rel (%p291) target = $region44
        $region43: #{tpu_custom_call.1} parent=27 // pred_region
          %p294 = scmp.lt.s32.totalorder %s24, 1
          %s295 = scalar_select %p294, %s24, 1
          %s296 = smul.addr %s295, 8
          %s297 = scalar_lea.vmem %s3, %s296
        $region44: #{tpu_custom_call.1} parent=27 // pred_fallthru
          _
      $region28: #{tpu_custom_call.1} parent=5 // pred_fallthru
        _
      %p298 = scmp.le.s32.totalorder 1, %s17
      %p299 = scmp.lt.s32.totalorder %s17, 3
      %p300 = pnand %p298, %p299
      %p301 = pneg %p300
      // Predicated region
      $region45: #{tpu_custom_call.1} parent=5 // pred_check
        _
      $region46: #{tpu_custom_call.1} parent=5 // pred_check_branch
        %303 = sbr.rel (%p300) target = $region48
      $region47: #{tpu_custom_call.1} parent=5 // pred_region
        %s304 = ssub.s32 %s17, 1
        // Predicated region
        $region49: #{tpu_custom_call.1} parent=47 // pred_check
          %p305 = pneg %p200
        $region50: #{tpu_custom_call.1} parent=47 // pred_check_branch
          %307 = sbr.rel (%p305) target = $region52
        $region51: #{tpu_custom_call.1} parent=47 // pred_region
          %309 = dma.done [#allocation4], 16
        $region52: #{tpu_custom_call.1} parent=47 // pred_fallthru
          _
        %310 = sfence
        %p311 = scmp.lt.s32.totalorder %s26, 1
        %s312 = scalar_select %p311, %s26, 1
        %p313 = scmp.lt.s32.totalorder %s27, 0
        %s314 = scalar_select %p313, %s27, 0
        %s315 = sadd.s32 %s314, %s312
        %s316 = smul.addr %s315, 8
        %s317 = scalar_lea.vmem %s0, %s316
        %p318 = pneg %p57
        %p319 = pneg %p54
        %p320 = scmp.lt.s32.totalorder %s26, 1
        %s321 = scalar_select %p320, %s26, 1
        %p322 = scmp.lt.s32.totalorder %s27, 0
        %s323 = scalar_select %p322, %s27, 0
        %s324 = sadd.s32 %s323, %s321
        %s325 = smul.addr %s324, 8
        %s326 = scalar_lea.vmem %s1, %s325
        %p327 = pneg %p85
        %p328 = pneg %p82
        %p329 = scmp.lt.s32.totalorder %s26, 1
        %s330 = scalar_select %p329, %s26, 1
        %s331 = smul.addr %s330, 2
        %s332 = smul.addr %s331, 8
        %s333 = scalar_lea.vmem %s2, %s332
        %p334 = pneg %p111
        %p335 = pneg %p108
        %p336 = scmp.lt.s32.totalorder %s26, 1
        %s337 = scalar_select %p336, %s26, 1
        %s338 = smul.addr %s337, 8
        %s339 = scalar_lea.vmem %s3, %s338
        %p340 = pneg %p137
        %p341 = pneg %p134
        %p342 = pneg %p158
        %p343 = pneg %p155
        %p344 = pneg %p179
        %p345 = pneg %p176
        %p346 = pneg %p200
        %p347 = pneg %p197
        %p348 = pneg %p228
        %p349 = pneg %p225
        %s350 = sand.u32 %s215, 1
        %s351 = scalar_lea.sflag [#allocation3], %s350
        %s352 = sand.u32 %s215, 1
        %s353 = smul.addr %s352, 8
        %s354 = scalar_lea.vmem [#allocation5], %s353
        %p355 = scmp.lt.s32.totalorder %s26, 1
        %s356 = scalar_select %p355, %s26, 1
        %p357 = scmp.lt.s32.totalorder %s27, 0
        %s358 = scalar_select %p357, %s27, 0
        %s359 = sadd.s32 %s358, %s356
        %s360 = smul.addr %s359, 8
        %s361 = scalar_lea.vmem %s0, %s360
        %p362 = scmp.lt.s32.totalorder %s26, 1
        %s363 = scalar_select %p362, %s26, 1
        %p364 = scmp.lt.s32.totalorder %s27, 0
        %s365 = scalar_select %p364, %s27, 0
        %s366 = sadd.s32 %s365, %s363
        %s367 = smul.addr %s366, 8
        %s368 = scalar_lea.vmem %s1, %s367
        %p369 = scmp.lt.s32.totalorder %s26, 1
        %s370 = scalar_select %p369, %s26, 1
        %s371 = smul.addr %s370, 2
        %s372 = smul.addr %s371, 8
        %s373 = scalar_lea.vmem %s2, %s372
        %p374 = scmp.lt.s32.totalorder %s26, 1
        %s375 = scalar_select %p374, %s26, 1
        %s376 = smul.addr %s375, 8
        %s377 = scalar_lea.vmem %s3, %s376
        %v378 = vld [vmem:[%s368] sm:$0xff]
        %v379 = vld [vmem:[%s373] sm:$0xff]
        %v380 = vld [vmem:[%s373 + $0x8] sm:$0xff]
        %v381 = vld [vmem:[%s377] sm:$0xff]
        %v382 = vld [vmem:[%s361] sm:$0xff]
        %v383 = vld [vmem:[%s4] sm:$0xff]
        %v384 = vld [vmem:[%s4 + $0x8] sm:$0xff]
        %vm385 = vcmask 130048
        %v387 = vsel %vm385, %v378, 0
        %389 = vmatpush.msra.mxu0 0.0
        %390 = vmatpush.msra.mxu0 0.0
        %391 = vmatpush.msra.mxu0 0.0
        %392 = vmatpush.msra.mxu0 0.0
        %393 = vmatpush.msra.mxu0 0.0
        %394 = vmatpush.msra.mxu0 0.0
        %395 = vmatpush.msra.mxu0 0.0
        %396 = vmatpush.msra.mxu0 0.0
        %397 = vmatpush.msra.mxu0 0.0
        %398 = vmatpush.msra.mxu0 0.0
        %399 = vmatpush.msra.mxu0 0.0
        %400 = vmatpush.msra.mxu0 0.0
        %401 = vmatpush.msra.mxu0 0.0
        %402 = vmatpush.msra.mxu0 0.0
        %403 = vmatpush.msra.mxu0 %v384
        %404 = vmatpush.msra.mxu0 %v383
        %405 = vmatmul.f32.gmra.mxu0 %v387
        %v406 = vpop.f32.mrf.mxu0
        %v407 = vadd.f32 0.0, %v406
        %408 = vdwg.mxu0
        %v409 = vld [vmem:[%s5] sm:$0xff]
        %v410 = vld [vmem:[%s5 + $0x8] sm:$0xff]
        %v411 = vld [vmem:[%s5 + $0x10] sm:$0xff]
        %v412 = vld [vmem:[%s5 + $0x18] sm:$0xff]
        %v414 = vsel %vm385, %v409, 0
        %v417 = vsel %vm385, %v410, 0
        %v420 = vsel %vm385, %v411, 0
        %v423 = vsel %vm385, %v412, 0
        %425 = vmatpush.msra.mxu0 0.0
        %426 = vmatpush.msra.mxu0 0.0
        %427 = vmatpush.msra.mxu0 0.0
        %428 = vmatpush.msra.mxu0 0.0
        %429 = vmatpush.msra.mxu0 0.0
        %430 = vmatpush.msra.mxu0 0.0
        %431 = vmatpush.msra.mxu0 0.0
        %432 = vmatpush.msra.mxu0 0.0
        %433 = vmatpush.msra.mxu0 0.0
        %434 = vmatpush.msra.mxu0 0.0
        %435 = vmatpush.msra.mxu0 0.0
        %436 = vmatpush.msra.mxu0 0.0
        %437 = vmatpush.msra.mxu0 0.0
        %438 = vmatpush.msra.mxu0 0.0
        %439 = vmatpush.msra.mxu0 %v380
        %440 = vmatpush.msra.mxu0 %v379
        %441 = vmatmul.f32.gmra.mxu0 %v414
        %v442 = vpop.f32.mrf.mxu0
        %v443 = vadd.f32 0.0, %v442
        %444 = vmatmul.f32.gmra.mxu0 %v417
        %v445 = vpop.f32.mrf.mxu0
        %v446 = vadd.f32 0.0, %v445
        %447 = vmatmul.f32.gmra.mxu0 %v420
        %v448 = vpop.f32.mrf.mxu0
        %v449 = vadd.f32 0.0, %v448
        %450 = vmatmul.f32.gmra.mxu0 %v423
        %v451 = vpop.f32.mrf.mxu0
        %v452 = vadd.f32 0.0, %v451
        %453 = vdwg.mxu0
        %s454 = sld [smem:[#allocation2]]
        %456 = vset.pattern.permute.xlu0 0
        %457 = vperm.xlu0 %456, %v407
        %v458 = vpop.permute.xlu0 %457
        %v460 = vperm.slane %v443, 0
        %v461 = vadd.f32 %v458, %v460
        %v462 = vtanh.pop %v461
        %v463 = vstv %s454
        %v464 = vmul.f32 %v463, %v462
        %v465 = vadd.f32 %v464, 0.0
        %s466 = sld [smem:[#allocation2 + $0x1]]
        %467 = vset.pattern.permute.xlu0 1
        %468 = vperm.xlu0 %467, %v407
        %v469 = vpop.permute.xlu0 %468
        %v471 = vperm.slane %v443, 1
        %v472 = vadd.f32 %v469, %v471
        %v473 = vtanh.pop %v472
        %v474 = vstv %s466
        %v475 = vmul.f32 %v474, %v473
        %v476 = vadd.f32 %v465, %v475
        %s477 = sld [smem:[#allocation2 + $0x2]]
        %478 = vset.pattern.permute.xlu0 2
        %479 = vperm.xlu0 %478, %v407
        %v480 = vpop.permute.xlu0 %479
        %v482 = vperm.slane %v443, 2
        %v483 = vadd.f32 %v480, %v482
        %v484 = vtanh.pop %v483
        %v485 = vstv %s477
        %v486 = vmul.f32 %v485, %v484
        %v487 = vadd.f32 %v476, %v486
        %s488 = sld [smem:[#allocation2 + $0x3]]
        %489 = vset.pattern.permute.xlu0 3
        %490 = vperm.xlu0 %489, %v407
        %v491 = vpop.permute.xlu0 %490
        %v493 = vperm.slane %v443, 3
        %v494 = vadd.f32 %v491, %v493
        %v495 = vtanh.pop %v494
        %v496 = vstv %s488
        %v497 = vmul.f32 %v496, %v495
        %v498 = vadd.f32 %v487, %v497
        %s499 = sld [smem:[#allocation2 + $0x4]]
        %500 = vset.pattern.permute.xlu0 4
        %501 = vperm.xlu0 %500, %v407
        %v502 = vpop.permute.xlu0 %501
        %v504 = vperm.slane %v443, 4
        %v505 = vadd.f32 %v502, %v504
        %v506 = vtanh.pop %v505
        %v507 = vstv %s499
        %v508 = vmul.f32 %v507, %v506
        %v509 = vadd.f32 %v498, %v508
        %s510 = sld [smem:[#allocation2 + $0x5]]
        %511 = vset.pattern.permute.xlu0 5
        %512 = vperm.xlu0 %511, %v407
        %v513 = vpop.permute.xlu0 %512
        %v515 = vperm.slane %v443, 5
        %v516 = vadd.f32 %v513, %v515
        %v517 = vtanh.pop %v516
        %v518 = vstv %s510
        %v519 = vmul.f32 %v518, %v517
        %v520 = vadd.f32 %v509, %v519
        %s521 = sld [smem:[#allocation2 + $0x6]]
        %522 = vset.pattern.permute.xlu0 6
        %523 = vperm.xlu0 %522, %v407
        %v524 = vpop.permute.xlu0 %523
        %v526 = vperm.slane %v443, 6
        %v527 = vadd.f32 %v524, %v526
        %v528 = vtanh.pop %v527
        %v529 = vstv %s521
        %v530 = vmul.f32 %v529, %v528
        %v531 = vadd.f32 %v520, %v530
        %s532 = sld [smem:[#allocation2 + $0x7]]
        %533 = vset.pattern.permute.xlu0 7
        %534 = vperm.xlu0 %533, %v407
        %v535 = vpop.permute.xlu0 %534
        %v537 = vperm.slane %v443, 7
        %v538 = vadd.f32 %v535, %v537
        %v539 = vtanh.pop %v538
        %v540 = vstv %s532
        %v541 = vmul.f32 %v540, %v539
        %v542 = vadd.f32 %v531, %v541
        %s543 = sld [smem:[#allocation2 + $0x8]]
        %544 = vset.pattern.permute.xlu0 8
        %545 = vperm.xlu0 %544, %v407
        %v546 = vpop.permute.xlu0 %545
        %v548 = vperm.slane %v446, 0
        %v549 = vadd.f32 %v546, %v548
        %v550 = vtanh.pop %v549
        %v551 = vstv %s543
        %v552 = vmul.f32 %v551, %v550
        %v553 = vadd.f32 %v542, %v552
        %s554 = sld [smem:[#allocation2 + $0x9]]
        %555 = vset.pattern.permute.xlu0 9
        %556 = vperm.xlu0 %555, %v407
        %v557 = vpop.permute.xlu0 %556
        %v559 = vperm.slane %v446, 1
        %v560 = vadd.f32 %v557, %v559
        %v561 = vtanh.pop %v560
        %v562 = vstv %s554
        %v563 = vmul.f32 %v562, %v561
        %v564 = vadd.f32 %v553, %v563
        %s565 = sld [smem:[#allocation2 + $0xa]]
        %566 = vset.pattern.permute.xlu0 10
        %567 = vperm.xlu0 %566, %v407
        %v568 = vpop.permute.xlu0 %567
        %v570 = vperm.slane %v446, 2
        %v571 = vadd.f32 %v568, %v570
        %v572 = vtanh.pop %v571
        %v573 = vstv %s565
        %v574 = vmul.f32 %v573, %v572
        %v575 = vadd.f32 %v564, %v574
        %s576 = sld [smem:[#allocation2 + $0xb]]
        %577 = vset.pattern.permute.xlu0 11
        %578 = vperm.xlu0 %577, %v407
        %v579 = vpop.permute.xlu0 %578
        %v581 = vperm.slane %v446, 3
        %v582 = vadd.f32 %v579, %v581
        %v583 = vtanh.pop %v582
        %v584 = vstv %s576
        %v585 = vmul.f32 %v584, %v583
        %v586 = vadd.f32 %v575, %v585
        %s587 = sld [smem:[#allocation2 + $0xc]]
        %588 = vset.pattern.permute.xlu0 12
        %589 = vperm.xlu0 %588, %v407
        %v590 = vpop.permute.xlu0 %589
        %v592 = vperm.slane %v446, 4
        %v593 = vadd.f32 %v590, %v592
        %v594 = vtanh.pop %v593
        %v595 = vstv %s587
        %v596 = vmul.f32 %v595, %v594
        %v597 = vadd.f32 %v586, %v596
        %s598 = sld [smem:[#allocation2 + $0xd]]
        %599 = vset.pattern.permute.xlu0 13
        %600 = vperm.xlu0 %599, %v407
        %v601 = vpop.permute.xlu0 %600
        %v603 = vperm.slane %v446, 5
        %v604 = vadd.f32 %v601, %v603
        %v605 = vtanh.pop %v604
        %v606 = vstv %s598
        %v607 = vmul.f32 %v606, %v605
        %v608 = vadd.f32 %v597, %v607
        %s609 = sld [smem:[#allocation2 + $0xe]]
        %610 = vset.pattern.permute.xlu0 14
        %611 = vperm.xlu0 %610, %v407
        %v612 = vpop.permute.xlu0 %611
        %v614 = vperm.slane %v446, 6
        %v615 = vadd.f32 %v612, %v614
        %v616 = vtanh.pop %v615
        %v617 = vstv %s609
        %v618 = vmul.f32 %v617, %v616
        %v619 = vadd.f32 %v608, %v618
        %s620 = sld [smem:[#allocation2 + $0xf]]
        %621 = vset.pattern.permute.xlu0 15
        %622 = vperm.xlu0 %621, %v407
        %v623 = vpop.permute.xlu0 %622
        %v625 = vperm.slane %v446, 7
        %v626 = vadd.f32 %v623, %v625
        %v627 = vtanh.pop %v626
        %v628 = vstv %s620
        %v629 = vmul.f32 %v628, %v627
        %v630 = vadd.f32 %v619, %v629
        %s631 = sld [smem:[#allocation2 + $0x10]]
        %632 = vset.pattern.permute.xlu0 16
        %633 = vperm.xlu0 %632, %v407
        %v634 = vpop.permute.xlu0 %633
        %v636 = vperm.slane %v449, 0
        %v637 = vadd.f32 %v634, %v636
        %v638 = vtanh.pop %v637
        %v639 = vstv %s631
        %v640 = vmul.f32 %v639, %v638
        %v641 = vadd.f32 %v630, %v640
        %s642 = sld [smem:[#allocation2 + $0x11]]
        %643 = vset.pattern.permute.xlu0 17
        %644 = vperm.xlu0 %643, %v407
        %v645 = vpop.permute.xlu0 %644
        %v647 = vperm.slane %v449, 1
        %v648 = vadd.f32 %v645, %v647
        %v649 = vtanh.pop %v648
        %v650 = vstv %s642
        %v651 = vmul.f32 %v650, %v649
        %v652 = vadd.f32 %v641, %v651
        %s653 = sld [smem:[#allocation2 + $0x12]]
        %654 = vset.pattern.permute.xlu0 18
        %655 = vperm.xlu0 %654, %v407
        %v656 = vpop.permute.xlu0 %655
        %v658 = vperm.slane %v449, 2
        %v659 = vadd.f32 %v656, %v658
        %v660 = vtanh.pop %v659
        %v661 = vstv %s653
        %v662 = vmul.f32 %v661, %v660
        %v663 = vadd.f32 %v652, %v662
        %s664 = sld [smem:[#allocation2 + $0x13]]
        %665 = vset.pattern.permute.xlu0 19
        %666 = vperm.xlu0 %665, %v407
        %v667 = vpop.permute.xlu0 %666
        %v669 = vperm.slane %v449, 3
        %v670 = vadd.f32 %v667, %v669
        %v671 = vtanh.pop %v670
        %v672 = vstv %s664
        %v673 = vmul.f32 %v672, %v671
        %v674 = vadd.f32 %v663, %v673
        %s675 = sld [smem:[#allocation2 + $0x14]]
        %676 = vset.pattern.permute.xlu0 20
        %677 = vperm.xlu0 %676, %v407
        %v678 = vpop.permute.xlu0 %677
        %v680 = vperm.slane %v449, 4
        %v681 = vadd.f32 %v678, %v680
        %v682 = vtanh.pop %v681
        %v683 = vstv %s675
        %v684 = vmul.f32 %v683, %v682
        %v685 = vadd.f32 %v674, %v684
        %s686 = sld [smem:[#allocation2 + $0x15]]
        %687 = vset.pattern.permute.xlu0 21
        %688 = vperm.xlu0 %687, %v407
        %v689 = vpop.permute.xlu0 %688
        %v691 = vperm.slane %v449, 5
        %v692 = vadd.f32 %v689, %v691
        %v693 = vtanh.pop %v692
        %v694 = vstv %s686
        %v695 = vmul.f32 %v694, %v693
        %v696 = vadd.f32 %v685, %v695
        %s697 = sld [smem:[#allocation2 + $0x16]]
        %698 = vset.pattern.permute.xlu0 22
        %699 = vperm.xlu0 %698, %v407
        %v700 = vpop.permute.xlu0 %699
        %v702 = vperm.slane %v449, 6
        %v703 = vadd.f32 %v700, %v702
        %v704 = vtanh.pop %v703
        %v705 = vstv %s697
        %v706 = vmul.f32 %v705, %v704
        %v707 = vadd.f32 %v696, %v706
        %s708 = sld [smem:[#allocation2 + $0x17]]
        %709 = vset.pattern.permute.xlu0 23
        %710 = vperm.xlu0 %709, %v407
        %v711 = vpop.permute.xlu0 %710
        %v713 = vperm.slane %v449, 7
        %v714 = vadd.f32 %v711, %v713
        %v715 = vtanh.pop %v714
        %v716 = vstv %s708
        %v717 = vmul.f32 %v716, %v715
        %v718 = vadd.f32 %v707, %v717
        %s719 = sld [smem:[#allocation2 + $0x18]]
        %720 = vset.pattern.permute.xlu0 24
        %721 = vperm.xlu0 %720, %v407
        %v722 = vpop.permute.xlu0 %721
        %v724 = vperm.slane %v452, 0
        %v725 = vadd.f32 %v722, %v724
        %v726 = vtanh.pop %v725
        %v727 = vstv %s719
        %v728 = vmul.f32 %v727, %v726
        %v729 = vadd.f32 %v718, %v728
        %s730 = sld [smem:[#allocation2 + $0x19]]
        %731 = vset.pattern.permute.xlu0 25
        %732 = vperm.xlu0 %731, %v407
        %v733 = vpop.permute.xlu0 %732
        %v735 = vperm.slane %v452, 1
        %v736 = vadd.f32 %v733, %v735
        %v737 = vtanh.pop %v736
        %v738 = vstv %s730
        %v739 = vmul.f32 %v738, %v737
        %v740 = vadd.f32 %v729, %v739
        %s741 = sld [smem:[#allocation2 + $0x1a]]
        %742 = vset.pattern.permute.xlu0 26
        %743 = vperm.xlu0 %742, %v407
        %v744 = vpop.permute.xlu0 %743
        %v746 = vperm.slane %v452, 2
        %v747 = vadd.f32 %v744, %v746
        %v748 = vtanh.pop %v747
        %v749 = vstv %s741
        %v750 = vmul.f32 %v749, %v748
        %v751 = vadd.f32 %v740, %v750
        %s752 = sld [smem:[#allocation2 + $0x1b]]
        %753 = vset.pattern.permute.xlu0 27
        %754 = vperm.xlu0 %753, %v407
        %v755 = vpop.permute.xlu0 %754
        %v757 = vperm.slane %v452, 3
        %v758 = vadd.f32 %v755, %v757
        %v759 = vtanh.pop %v758
        %v760 = vstv %s752
        %v761 = vmul.f32 %v760, %v759
        %v762 = vadd.f32 %v751, %v761
        %s763 = sld [smem:[#allocation2 + $0x1c]]
        %764 = vset.pattern.permute.xlu0 28
        %765 = vperm.xlu0 %764, %v407
        %v766 = vpop.permute.xlu0 %765
        %v768 = vperm.slane %v452, 4
        %v769 = vadd.f32 %v766, %v768
        %v770 = vtanh.pop %v769
        %v771 = vstv %s763
        %v772 = vmul.f32 %v771, %v770
        %v773 = vadd.f32 %v762, %v772
        %s774 = sld [smem:[#allocation2 + $0x1d]]
        %775 = vset.pattern.permute.xlu0 29
        %776 = vperm.xlu0 %775, %v407
        %v777 = vpop.permute.xlu0 %776
        %v779 = vperm.slane %v452, 5
        %v780 = vadd.f32 %v777, %v779
        %v781 = vtanh.pop %v780
        %v782 = vstv %s774
        %v783 = vmul.f32 %v782, %v781
        %v784 = vadd.f32 %v773, %v783
        %s785 = sld [smem:[#allocation2 + $0x1e]]
        %786 = vset.pattern.permute.xlu0 30
        %787 = vperm.xlu0 %786, %v407
        %v788 = vpop.permute.xlu0 %787
        %v790 = vperm.slane %v452, 6
        %v791 = vadd.f32 %v788, %v790
        %v792 = vtanh.pop %v791
        %v793 = vstv %s785
        %v794 = vmul.f32 %v793, %v792
        %v795 = vadd.f32 %v784, %v794
        %s796 = sld [smem:[#allocation2 + $0x1f]]
        %797 = vset.pattern.permute.xlu0 31
        %798 = vperm.xlu0 %797, %v407
        %v799 = vpop.permute.xlu0 %798
        %v801 = vperm.slane %v452, 7
        %v802 = vadd.f32 %v799, %v801
        %v803 = vtanh.pop %v802
        %v804 = vstv %s796
        %v805 = vmul.f32 %v804, %v803
        %v806 = vadd.f32 %v795, %v805
        %v807 = vlaneseq
        %v808 = vand.u32 %v807, 127
        %809 = vset.pattern.permute.xlu0 0
        %810 = vperm.xlu0 %809, %v382
        %v811 = vpop.permute.xlu0 %810
        %vm812 = vcmp.lt.s32.totalorder %v808, %v811
        %v813 = vsel %vm812, %v806, -1e+20
        %vm814 = vcmask 64512
        %v815 = vsel %vm814, %v813, -inf
        %816 = vmax.xlane.f32.xlu0 %v815
        %v817 = vpop.xlane.xlu0 %816
        %v818 = vsub.f32 %v813, %v817
        %v819 = vmul.f32 %v818, 1.442695
        %v820 = vpow.pop %v819
        %v821 = vsel %vm814, %v820, 0.0
        %822 = vadd.xlane.f32.xlu0 %v821
        %v823 = vpop.xlane.xlu0 %822
        %v824 = vrcp.pop %v823
        %v825 = vmul.f32 %v823, %v824
        %v826 = vsub.f32 2.0, %v825
        %v827 = vmul.f32 %v824, %v826
        %v828 = vmul.f32 %v820, %v827
        %v830 = vsel %vm814, %v828, 0
        %832 = vmatpush.msra.mxu0 0.0
        %833 = vmatpush.msra.mxu0 0.0
        %834 = vmatpush.msra.mxu0 0.0
        %835 = vmatpush.msra.mxu0 0.0
        %836 = vmatpush.msra.mxu0 0.0
        %837 = vmatpush.msra.mxu0 0.0
        %838 = vmatpush.msra.mxu0 0.0
        %839 = vmatpush.msra.mxu0 0.0
        %840 = vmatpush.msra.mxu0 0.0
        %841 = vmatpush.msra.mxu0 0.0
        %842 = vmatpush.msra.mxu0 0.0
        %843 = vmatpush.msra.mxu0 0.0
        %844 = vmatpush.msra.mxu0 0.0
        %845 = vmatpush.msra.mxu0 0.0
        %846 = vmatpush.msra.mxu0 0.0
        %847 = vmatpush.msra.mxu0 %v381
        %848 = vmatmul.f32.gmra.mxu0 %v830
        %v849 = vpop.f32.mrf.mxu0
        %v850 = vadd.f32 0.0, %v849
        %851 = vdwg.mxu0
        %852 = vst [vmem:[%s354] sm:$0xff] %v850
        %s853 = sand.u32 %s215, 1
        %s854 = scalar_lea.sflag [#allocation3], %s853
        %s855 = sand.u32 %s215, 1
        %s856 = smul.addr %s855, 8
        %s857 = scalar_lea.vmem [#allocation5], %s856
        // Predicated region
        $region53: #{tpu_custom_call.1} parent=47 // pred_check
          %p858 = pneg %p225
        $region54: #{tpu_custom_call.1} parent=47 // pred_check_branch
          %860 = sbr.rel (%p858) target = $region56
        $region55: #{tpu_custom_call.1} parent=47 // pred_region
          %862 = vsyncadd %s854, 0
          %s863 = sadd.s32 %s27, %s26
          %s864 = smul.addr %s863, 8
          %s865 = scalar_lea.hbm %s7, %s864
          %s867 = sshll.u32 %s857, 4
          %s868 = int_to_ptr.vmem [resolvable:$true] %s867
          %s869 = sshll.u32 %s865, 4
          %s870 = int_to_ptr.hbm [resolvable:$true] %s869
          %872 = dma.vmem_to_hbm [thread:$0]  %s868, 128, %s870, %s854
        $region56: #{tpu_custom_call.1} parent=47 // pred_fallthru
          _
      $region48: #{tpu_custom_call.1} parent=5 // pred_fallthru
        _
      %p873 = scmp.le.s32.totalorder 2, %s17
      // Predicated region
      $region57: #{tpu_custom_call.1} parent=5 // pred_check
        %p874 = pneg %p873
      $region58: #{tpu_custom_call.1} parent=5 // pred_check_branch
        %876 = sbr.rel (%p874) target = $region60
      $region59: #{tpu_custom_call.1} parent=5 // pred_region
        %s877 = ssub.s32 %s17, 2
        // Predicated region
        $region61: #{tpu_custom_call.1} parent=59 // pred_check
          %p878 = pneg %p231
        $region62: #{tpu_custom_call.1} parent=59 // pred_check_branch
          %880 = sbr.rel (%p878) target = $region64
        $region63: #{tpu_custom_call.1} parent=59 // pred_region
          %s881 = sand.u32 %s216, 1
          %s882 = scalar_lea.sflag [#allocation3], %s881
          %s883 = sand.u32 %s216, 1
          %s884 = smul.addr %s883, 8
          %s885 = scalar_lea.vmem [#allocation5], %s884
          %887 = dma.done %s882, 128
        $region64: #{tpu_custom_call.1} parent=59 // pred_fallthru
          _
      $region60: #{tpu_custom_call.1} parent=5 // pred_fallthru
        _
    $region6: #{tpu_custom_call.1} parent=1 // loop_footer
      %s21 = sadd.s32 1, %s17
    $region7: #{tpu_custom_call.1} parent=1 // loop_footer_branch
      %16 = sbr.rel target = $region3
    $region8: #{tpu_custom_call.1} parent=1 // loop_exit
      _
    %888 = vsyncpa [#allocation3], 1
    %s889 = scalar_lea.sflag [#allocation3], 1
    %890 = vsyncpa %s889, 1
    %891 = vsyncpa [#allocation4], 1
    %s892 = scalar_lea.sflag [#allocation4], 1
    %893 = vsyncpa %s892, 1

</llo_original>
